<compile_context>
chip_gen: v6e
topology: v6e:2x2x1
jax: 0.10.0
libtpu: 0.0.40
codegen_flags: <defaults>
</compile_context>

<pallas_src>
import jax
import jax.numpy as jnp
from jax import lax
from jax.experimental import pallas as pl
from jax.experimental.pallas import tpu as pltpu


def _round_up(x, m):
    return ((x + m - 1) // m) * m


def lstm_fc_kernel(x_ref,      # (T*Bp, E)   embedded tokens, bf16, time-major
                   wih_ref,    # (E, 4Hp)    input->hidden weights, bf16
                   whh_ref,    # (Hp, 4Hp)   hidden->hidden weights, f32
                   b_ref,      # (1, 4Hp)    b_ih + b_hh, f32
                   wfc_ref,    # (Hp, TILE_V) final linear weight tile, bf16
                   bfc_ref,    # (1, TILE_V)  final linear bias tile, f32
                   out_ref,    # (Bp, TILE_V) logits tile, f32
                   h_scr,      # (Bp, Hp)     scratch: final hidden state (bf16)
                   gx_scr):    # (T*Bp, 4Hp)  scratch: hoisted input projection
    j = pl.program_id(0)
    Hp = whh_ref.shape[0]
    Bp = h_scr.shape[0]
    T = x_ref.shape[0] // Bp

    # The recurrence only runs on the first vocab tile; h_scr persists across
    # the (sequential, "arbitrary") grid so later tiles reuse the final h.
    @pl.when(j == 0)
    def _():
        # Hoisted input projection: one big MXU matmul, bias added once.
        gx_scr[...] = (
            jnp.dot(x_ref[...], wih_ref[...],
                    preferred_element_type=jnp.float32)
            + b_ref[...]
        )

        def step(t, carry):
            h, c = carry
            row = pl.multiple_of(t * Bp, Bp)
            # Only the serial dependency lives in the loop: h @ W_hh.
            g = gx_scr[pl.ds(row, Bp), :] + jnp.dot(
                h, whh_ref[...], preferred_element_type=jnp.float32)
            # Lane-aligned gate slices (Hp is a multiple of 128). PyTorch
            # gate order: i, f, g, o.
            i_g = jax.nn.sigmoid(g[:, 0 * Hp:1 * Hp])
            f_g = jax.nn.sigmoid(g[:, 1 * Hp:2 * Hp])
            g_g = jnp.tanh(g[:, 2 * Hp:3 * Hp])
            o_g = jax.nn.sigmoid(g[:, 3 * Hp:4 * Hp])
            c = f_g * c + i_g * g_g
            h = o_g * jnp.tanh(c)
            return (h, c)

        h0 = jnp.zeros((Bp, Hp), jnp.float32)
        c0 = jnp.zeros((Bp, Hp), jnp.float32)
        h_fin, _ = lax.fori_loop(0, T, step, (h0, c0), unroll=True)
        # Single bf16 cast + store; reused by every vocab tile below.
        h_scr[...] = h_fin.astype(h_scr.dtype)

    # Final Linear on the last hidden state for this vocab tile
    # (== fc(out[:, -1, :]) in PyTorch). Lane-dense (Bp, TILE_V) store.
    out_ref[...] = (
        jnp.dot(h_scr[...], wfc_ref[...],
                preferred_element_type=jnp.float32)
        + bfc_ref[...]
    )


def prepare_params(raw):
    """Pad / transpose / cast PyTorch-layout params into kernel layout.

    Hidden dim is zero-padded per gate to Hp (multiple of 128); padded hidden
    units provably stay 0 through the recurrence, so results are unchanged.
    Vocab is zero-padded to Vp (multiple of 128); padded logits are sliced off.
    """
    emb = raw["embedding"]                       # (V, E)
    w_ih, w_hh = raw["w_ih"], raw["w_hh"]        # (4H, E), (4H, H)
    b = raw["b_ih"] + raw["b_hh"]                # (4H,)
    w_fc, b_fc = raw["w_fc"], raw["b_fc"]        # (V, H), (V,)

    V, E = emb.shape
    H = w_hh.shape[1]
    Hp = _round_up(H, 128)
    Vp = _round_up(V, 128)

    def pad_gate_cols(w):                        # (4H, K) -> (K, 4Hp)
        K = w.shape[1]
        w4 = w.reshape(4, H, K)
        w4 = jnp.pad(w4, ((0, 0), (0, Hp - H), (0, 0)))
        return jnp.transpose(w4, (2, 0, 1)).reshape(K, 4 * Hp)

    w_ih_t = pad_gate_cols(w_ih)                                  # (E, 4Hp)
    w_hh_t = jnp.pad(pad_gate_cols(w_hh), ((0, Hp - H), (0, 0)))  # (Hp, 4Hp)
    b_gates = jnp.pad(b.reshape(4, H), ((0, 0), (0, Hp - H)))
    b_gates = b_gates.reshape(1, 4 * Hp)                          # (1, 4Hp)

    w_fc_t = jnp.pad(w_fc.T, ((0, Hp - H), (0, Vp - V)))          # (Hp, Vp)
    b_fc_p = jnp.pad(b_fc, (0, Vp - V))[None, :]                  # (1, Vp)

    return {
        "embedding": emb.astype(jnp.bfloat16),          # bf16 gather + MXU feed
        "w_ih_t": w_ih_t.astype(jnp.bfloat16),
        "w_hh_t": w_hh_t.astype(jnp.float32),           # serial path stays f32
        "b_gates": b_gates.astype(jnp.float32),
        "w_fc_t": w_fc_t.astype(jnp.bfloat16),
        "b_fc": b_fc_p.astype(jnp.float32),
        "dims": {"V": V, "E": E, "H": H, "Hp": Hp, "Vp": Vp},
    }


def movie_title_generator_forward(tokens, params):
    """tokens: int32 (B, T). Returns logits (B, V) in float32."""
    dims = params["dims"]
    V, E, Hp, Vp = dims["V"], dims["E"], dims["Hp"], dims["Vp"]
    B, T = tokens.shape
    Bp = _round_up(max(B, 1), 8)

    # Pad batch (padded rows use token 0; sliced off at the end), then gather
    # directly into (T, Bp, E) by transposing the tiny token matrix — avoids a
    # full (B, T, E) HBM transpose of the embedded activations.
    tok_p = jnp.pad(tokens, ((0, Bp - B), (0, 0)))
    x = jnp.take(params["embedding"], tok_p.T, axis=0)   # (T, Bp, E) bf16
    x2d = x.reshape(T * Bp, E)
    # TODO(synk): the embedding gather itself stays as JAX glue; an in-kernel
    # gather would need a scalar-prefetch + pl.Element row-gather grid.

    # Vocab-tile size: lane-dense multiple of 128 that divides Vp.
    tile_v = 512 if Vp % 512 == 0 else (256 if Vp % 256 == 0 else 128)
    n_v = Vp // tile_v

    out_padded = pl.pallas_call(
        lstm_fc_kernel,
        out_shape=jax.ShapeDtypeStruct((Bp, Vp), jnp.float32),
        grid_spec=pltpu.PrefetchScalarGridSpec(
            num_scalar_prefetch=0,
            grid=(n_v,),
            in_specs=[
                pl.BlockSpec((T * Bp, E), lambda j: (0, 0)),       # x (resident)
                pl.BlockSpec((E, 4 * Hp), lambda j: (0, 0)),       # W_ih
                pl.BlockSpec((Hp, 4 * Hp), lambda j: (0, 0)),      # W_hh
                pl.BlockSpec((1, 4 * Hp), lambda j: (0, 0)),       # bias
                pl.BlockSpec((Hp, tile_v), lambda j: (0, j)),      # W_fc tile
                pl.BlockSpec((1, tile_v), lambda j: (0, j)),       # b_fc tile
            ],
            out_specs=pl.BlockSpec((Bp, tile_v), lambda j: (0, j)),
            scratch_shapes=[
                pltpu.VMEM((Bp, Hp), jnp.bfloat16),         # final h (persists)
                pltpu.VMEM((T * Bp, 4 * Hp), jnp.float32),  # hoisted x-projection
            ],
        ),
        compiler_params=pltpu.CompilerParams(
            # Recurrence result (scratch) is reused by later vocab tiles, so the
            # grid axis must stay sequential.
            dimension_semantics=("arbitrary",),
            vmem_limit_bytes=64 * 1024 * 1024,
        ),
    )(x2d, params["w_ih_t"], params["w_hh_t"], params["b_gates"],
      params["w_fc_t"], params["b_fc"])

    return out_padded[:B, :V]


def init_params(key, vocab_size, embed_dim, hidden_dim):
    """Deterministic synthetic parameters matching nn.{Embedding,LSTM,Linear}."""
    ks = jax.random.split(key, 7)
    emb = jax.random.normal(ks[0], (vocab_size, embed_dim), jnp.float32) * 0.1
    w_ih = jax.random.normal(ks[1], (4 * hidden_dim, embed_dim), jnp.float32) * 0.1
    w_hh = jax.random.normal(ks[2], (4 * hidden_dim, hidden_dim), jnp.float32) * 0.1
    b_ih = jax.random.normal(ks[3], (4 * hidden_dim,), jnp.float32) * 0.1
    b_hh = jax.random.normal(ks[4], (4 * hidden_dim,), jnp.float32) * 0.1
    w_fc = jax.random.normal(ks[5], (vocab_size, hidden_dim), jnp.float32) * 0.1
    b_fc = jax.random.normal(ks[6], (vocab_size,), jnp.float32) * 0.1
    return {"embedding": emb, "w_ih": w_ih, "w_hh": w_hh,
            "b_ih": b_ih, "b_hh": b_hh, "w_fc": w_fc, "b_fc": b_fc}


def reference_forward(tokens, raw):
    """Pure-JAX f32 reference matching the PyTorch module."""
    emb, w_ih, w_hh = raw["embedding"], raw["w_ih"], raw["w_hh"]
    b = raw["b_ih"] + raw["b_hh"]
    w_fc, b_fc = raw["w_fc"], raw["b_fc"]
    H = w_hh.shape[1]
    x = jnp.take(emb, tokens, axis=0)                 # (B, T, E)
    B, T, _ = x.shape
    h = jnp.zeros((B, H), jnp.float32)
    c = jnp.zeros((B, H), jnp.float32)
    for t in range(T):
        g = x[:, t] @ w_ih.T + h @ w_hh.T + b
        i = jax.nn.sigmoid(g[:, 0 * H:1 * H])
        f = jax.nn.sigmoid(g[:, 1 * H:2 * H])
        gg = jnp.tanh(g[:, 2 * H:3 * H])
        o = jax.nn.sigmoid(g[:, 3 * H:4 * H])
        c = f * c + i * gg
        h = o * jnp.tanh(c)
    return h @ w_fc.T + b_fc


if __name__ == "__main__":
    vocab_size, embed_dim, hidden_dim = 32, 16, 32
    batch, seq = 2, 8

    key = jax.random.PRNGKey(0)
    k_params, k_tokens = jax.random.split(key)
    raw = init_params(k_params, vocab_size, embed_dim, hidden_dim)
    params = prepare_params(raw)
    tokens = jax.random.randint(k_tokens, (batch, seq), 0, vocab_size,
                                dtype=jnp.int32)

    logits = movie_title_generator_forward(tokens, params)
    jax.block_until_ready(logits)
    assert logits.shape == (batch, vocab_size)

    # Loose tolerance: kernel feeds bf16 operands to the two large matmuls
    # (f32 accumulation); the recurrence itself is f32.
    ref = reference_forward(tokens, raw)
    assert jnp.allclose(logits, ref, atol=2e-2, rtol=2e-2), (
        float(jnp.max(jnp.abs(logits - ref))))

    print("KERNEL_OK")
</pallas_src>

<mosaic_0001>
module attributes {stable_mosaic.version = 11 : i64} {
  func.func @lstm_fc_kernel(%arg0: i32, %arg1: memref<64x16xbf16, #tpu.memory_space<vmem>>, %arg2: memref<16x512xbf16, #tpu.memory_space<vmem>>, %arg3: memref<128x512xf32, #tpu.memory_space<vmem>>, %arg4: memref<1x512xf32, #tpu.memory_space<vmem>>, %arg5: memref<128x128xbf16, #tpu.memory_space<vmem>>, %arg6: memref<1x128xf32, #tpu.memory_space<vmem>>, %arg7: memref<8x128xf32, #tpu.memory_space<vmem>>, %arg8: memref<8x128xbf16, #tpu.memory_space<vmem>>, %arg9: memref<64x512xf32, #tpu.memory_space<vmem>>) attributes {dimension_semantics = [#tpu.dimension_semantics<arbitrary>], iteration_bounds = array<i64: 1>, scalar_prefetch = 0 : i64, scratch_operands = 2 : i64, tpu.core_type = #tpu.core_type<tc>, window_params = [{pipeline_mode = #tpu.pipeline_mode<synchronous>, transform_indices = @transform_0, window_bounds = array<i64: 64, 16>}, {pipeline_mode = #tpu.pipeline_mode<synchronous>, transform_indices = @transform_1, window_bounds = array<i64: 16, 512>}, {pipeline_mode = #tpu.pipeline_mode<synchronous>, transform_indices = @transform_2, window_bounds = array<i64: 128, 512>}, {pipeline_mode = #tpu.pipeline_mode<synchronous>, transform_indices = @transform_3, window_bounds = array<i64: 1, 512>}, {transform_indices = @transform_4, window_bounds = array<i64: 128, 128>}, {transform_indices = @transform_5, window_bounds = array<i64: 1, 128>}, {transform_indices = @transform_6, window_bounds = array<i64: 8, 128>}]} {
    %c0_i32 = arith.constant 0 : i32
    %0 = arith.cmpi eq, %arg0, %c0_i32 : i32
    %1 = arith.extui %0 : i1 to i32
    %c0_i32_0 = arith.constant 0 : i32
    %2 = arith.cmpi ne, %1, %c0_i32_0 : i32
    scf.if %2 {
      %c0_8 = arith.constant 0 : index
      %c0_9 = arith.constant 0 : index
      %10 = vector.load %arg1[%c0_8, %c0_9] : memref<64x16xbf16, #tpu.memory_space<vmem>>, vector<64x16xbf16>
      %c0_10 = arith.constant 0 : index
      %c0_11 = arith.constant 0 : index
      %11 = vector.load %arg2[%c0_10, %c0_11] : memref<16x512xbf16, #tpu.memory_space<vmem>>, vector<16x512xbf16>
      %cst_12 = arith.constant dense<0.000000e+00> : vector<64x512xf32>
      %12 = tpu.matmul %10, %11, %cst_12 {dimension_numbers = #tpu.dot_dimension_numbers<[1], [0], [0], [1], [0, 0, 1, 1], [], []>} : vector<64x16xbf16>, vector<16x512xbf16>, vector<64x512xf32> -> vector<64x512xf32>
      %c0_13 = arith.constant 0 : index
      %c0_14 = arith.constant 0 : index
      %13 = vector.load %arg4[%c0_13, %c0_14] : memref<1x512xf32, #tpu.memory_space<vmem>>, vector<1x512xf32>
      %14 = vector.broadcast %13 : vector<1x512xf32> to vector<64x512xf32>
      %15 = arith.addf %12, %14 : vector<64x512xf32>
      %c0_15 = arith.constant 0 : index
      %c0_16 = arith.constant 0 : index
      %16 = vector.load %arg9[%c0_15, %c0_16] : memref<64x512xf32, #tpu.memory_space<vmem>>, vector<64x512xf32>
      tpu.vector_store %arg9[%c0_15, %c0_16], %15 {strides = array<i32>} : memref<64x512xf32, #tpu.memory_space<vmem>>, vector<64x512xf32>,
      %cst_17 = arith.constant 0.000000e+00 : f32
      %17 = vector.broadcast %cst_17 : f32 to vector<8x128xf32>
      %cst_18 = arith.constant 0.000000e+00 : f32
      %18 = vector.broadcast %cst_18 : f32 to vector<8x128xf32>
      %c0_i32_19 = arith.constant 0 : i32
      %c8_i32 = arith.constant 8 : i32
      %19 = arith.muli %c0_i32_19, %c8_i32 : i32
      %20 = tpu.assume_multiple %19, 8 : i32
      %21 = arith.index_cast %20 : i32 to index
      %c0_20 = arith.constant 0 : index
      %22 = vector.load %arg9[%21, %c0_20] : memref<64x512xf32, #tpu.memory_space<vmem>>, vector<8x512xf32>
      %c0_21 = arith.constant 0 : index
      %c0_22 = arith.constant 0 : index
      %23 = vector.load %arg3[%c0_21, %c0_22] : memref<128x512xf32, #tpu.memory_space<vmem>>, vector<128x512xf32>
      %cst_23 = arith.constant dense<0.000000e+00> : vector<8x512xf32>
      %24 = tpu.matmul %17, %23, %cst_23 {dimension_numbers = #tpu.dot_dimension_numbers<[1], [0], [0], [1], [0, 0, 1, 1], [], []>} : vector<8x128xf32>, vector<128x512xf32>, vector<8x512xf32> -> vector<8x512xf32>
      %25 = arith.addf %22, %24 : vector<8x512xf32>
      %26 = vector.extract_strided_slice %25 {offsets = [0, 0], sizes = [8, 128], strides = [1, 1]} : vector<8x512xf32> to vector<8x128xf32>
      %27 = arith.negf %26 : vector<8x128xf32>
      %28 = math.exp %27 : vector<8x128xf32>
      %cst_24 = arith.constant 1.000000e+00 : f32
      %29 = vector.broadcast %cst_24 : f32 to vector<8x128xf32>
      %30 = arith.addf %29, %28 : vector<8x128xf32>
      %31 = arith.divf %29, %30 : vector<8x128xf32>
      %32 = vector.extract_strided_slice %25 {offsets = [0, 128], sizes = [8, 128], strides = [1, 1]} : vector<8x512xf32> to vector<8x128xf32>
      %33 = arith.negf %32 : vector<8x128xf32>
      %34 = math.exp %33 : vector<8x128xf32>
      %cst_25 = arith.constant 1.000000e+00 : f32
      %35 = vector.broadcast %cst_25 : f32 to vector<8x128xf32>
      %36 = arith.addf %35, %34 : vector<8x128xf32>
      %37 = arith.divf %35, %36 : vector<8x128xf32>
      %38 = vector.extract_strided_slice %25 {offsets = [0, 256], sizes = [8, 128], strides = [1, 1]} : vector<8x512xf32> to vector<8x128xf32>
      %39 = math.tanh %38 : vector<8x128xf32>
      %40 = vector.extract_strided_slice %25 {offsets = [0, 384], sizes = [8, 128], strides = [1, 1]} : vector<8x512xf32> to vector<8x128xf32>
      %41 = arith.negf %40 : vector<8x128xf32>
      %42 = math.exp %41 : vector<8x128xf32>
      %cst_26 = arith.constant 1.000000e+00 : f32
      %43 = vector.broadcast %cst_26 : f32 to vector<8x128xf32>
      %44 = arith.addf %43, %42 : vector<8x128xf32>
      %45 = arith.divf %43, %44 : vector<8x128xf32>
      %46 = arith.mulf %37, %18 : vector<8x128xf32>
      %47 = arith.mulf %31, %39 : vector<8x128xf32>
      %48 = arith.addf %46, %47 : vector<8x128xf32>
      %49 = math.tanh %48 : vector<8x128xf32>
      %50 = arith.mulf %45, %49 : vector<8x128xf32>
      %c1_i32 = arith.constant 1 : i32
      %c8_i32_27 = arith.constant 8 : i32
      %51 = arith.muli %c1_i32, %c8_i32_27 : i32
      %52 = tpu.assume_multiple %51, 8 : i32
      %53 = arith.index_cast %52 : i32 to index
      %c0_28 = arith.constant 0 : index
      %54 = vector.load %arg9[%53, %c0_28] : memref<64x512xf32, #tpu.memory_space<vmem>>, vector<8x512xf32>
      %c0_29 = arith.constant 0 : index
      %c0_30 = arith.constant 0 : index
      %55 = vector.load %arg3[%c0_29, %c0_30] : memref<128x512xf32, #tpu.memory_space<vmem>>, vector<128x512xf32>
      %cst_31 = arith.constant dense<0.000000e+00> : vector<8x512xf32>
      %56 = tpu.matmul %50, %55, %cst_31 {dimension_numbers = #tpu.dot_dimension_numbers<[1], [0], [0], [1], [0, 0, 1, 1], [], []>} : vector<8x128xf32>, vector<128x512xf32>, vector<8x512xf32> -> vector<8x512xf32>
      %57 = arith.addf %54, %56 : vector<8x512xf32>
      %58 = vector.extract_strided_slice %57 {offsets = [0, 0], sizes = [8, 128], strides = [1, 1]} : vector<8x512xf32> to vector<8x128xf32>
      %59 = arith.negf %58 : vector<8x128xf32>
      %60 = math.exp %59 : vector<8x128xf32>
      %cst_32 = arith.constant 1.000000e+00 : f32
      %61 = vector.broadcast %cst_32 : f32 to vector<8x128xf32>
      %62 = arith.addf %61, %60 : vector<8x128xf32>
      %63 = arith.divf %61, %62 : vector<8x128xf32>
      %64 = vector.extract_strided_slice %57 {offsets = [0, 128], sizes = [8, 128], strides = [1, 1]} : vector<8x512xf32> to vector<8x128xf32>
      %65 = arith.negf %64 : vector<8x128xf32>
      %66 = math.exp %65 : vector<8x128xf32>
      %cst_33 = arith.constant 1.000000e+00 : f32
      %67 = vector.broadcast %cst_33 : f32 to vector<8x128xf32>
      %68 = arith.addf %67, %66 : vector<8x128xf32>
      %69 = arith.divf %67, %68 : vector<8x128xf32>
      %70 = vector.extract_strided_slice %57 {offsets = [0, 256], sizes = [8, 128], strides = [1, 1]} : vector<8x512xf32> to vector<8x128xf32>
      %71 = math.tanh %70 : vector<8x128xf32>
      %72 = vector.extract_strided_slice %57 {offsets = [0, 384], sizes = [8, 128], strides = [1, 1]} : vector<8x512xf32> to vector<8x128xf32>
      %73 = arith.negf %72 : vector<8x128xf32>
      %74 = math.exp %73 : vector<8x128xf32>
      %cst_34 = arith.constant 1.000000e+00 : f32
      %75 = vector.broadcast %cst_34 : f32 to vector<8x128xf32>
      %76 = arith.addf %75, %74 : vector<8x128xf32>
      %77 = arith.divf %75, %76 : vector<8x128xf32>
      %78 = arith.mulf %69, %48 : vector<8x128xf32>
      %79 = arith.mulf %63, %71 : vector<8x128xf32>
      %80 = arith.addf %78, %79 : vector<8x128xf32>
      %81 = math.tanh %80 : vector<8x128xf32>
      %82 = arith.mulf %77, %81 : vector<8x128xf32>
      %c2_i32 = arith.constant 2 : i32
      %c8_i32_35 = arith.constant 8 : i32
      %83 = arith.muli %c2_i32, %c8_i32_35 : i32
      %84 = tpu.assume_multiple %83, 8 : i32
      %85 = arith.index_cast %84 : i32 to index
      %c0_36 = arith.constant 0 : index
      %86 = vector.load %arg9[%85, %c0_36] : memref<64x512xf32, #tpu.memory_space<vmem>>, vector<8x512xf32>
      %c0_37 = arith.constant 0 : index
      %c0_38 = arith.constant 0 : index
      %87 = vector.load %arg3[%c0_37, %c0_38] : memref<128x512xf32, #tpu.memory_space<vmem>>, vector<128x512xf32>
      %cst_39 = arith.constant dense<0.000000e+00> : vector<8x512xf32>
      %88 = tpu.matmul %82, %87, %cst_39 {dimension_numbers = #tpu.dot_dimension_numbers<[1], [0], [0], [1], [0, 0, 1, 1], [], []>} : vector<8x128xf32>, vector<128x512xf32>, vector<8x512xf32> -> vector<8x512xf32>
      %89 = arith.addf %86, %88 : vector<8x512xf32>
      %90 = vector.extract_strided_slice %89 {offsets = [0, 0], sizes = [8, 128], strides = [1, 1]} : vector<8x512xf32> to vector<8x128xf32>
      %91 = arith.negf %90 : vector<8x128xf32>
      %92 = math.exp %91 : vector<8x128xf32>
      %cst_40 = arith.constant 1.000000e+00 : f32
      %93 = vector.broadcast %cst_40 : f32 to vector<8x128xf32>
      %94 = arith.addf %93, %92 : vector<8x128xf32>
      %95 = arith.divf %93, %94 : vector<8x128xf32>
      %96 = vector.extract_strided_slice %89 {offsets = [0, 128], sizes = [8, 128], strides = [1, 1]} : vector<8x512xf32> to vector<8x128xf32>
      %97 = arith.negf %96 : vector<8x128xf32>
      %98 = math.exp %97 : vector<8x128xf32>
      %cst_41 = arith.constant 1.000000e+00 : f32
      %99 = vector.broadcast %cst_41 : f32 to vector<8x128xf32>
      %100 = arith.addf %99, %98 : vector<8x128xf32>
      %101 = arith.divf %99, %100 : vector<8x128xf32>
      %102 = vector.extract_strided_slice %89 {offsets = [0, 256], sizes = [8, 128], strides = [1, 1]} : vector<8x512xf32> to vector<8x128xf32>
      %103 = math.tanh %102 : vector<8x128xf32>
      %104 = vector.extract_strided_slice %89 {offsets = [0, 384], sizes = [8, 128], strides = [1, 1]} : vector<8x512xf32> to vector<8x128xf32>
      %105 = arith.negf %104 : vector<8x128xf32>
      %106 = math.exp %105 : vector<8x128xf32>
      %cst_42 = arith.constant 1.000000e+00 : f32
      %107 = vector.broadcast %cst_42 : f32 to vector<8x128xf32>
      %108 = arith.addf %107, %106 : vector<8x128xf32>
      %109 = arith.divf %107, %108 : vector<8x128xf32>
      %110 = arith.mulf %101, %80 : vector<8x128xf32>
      %111 = arith.mulf %95, %103 : vector<8x128xf32>
      %112 = arith.addf %110, %111 : vector<8x128xf32>
      %113 = math.tanh %112 : vector<8x128xf32>
      %114 = arith.mulf %109, %113 : vector<8x128xf32>
      %c3_i32 = arith.constant 3 : i32
      %c8_i32_43 = arith.constant 8 : i32
      %115 = arith.muli %c3_i32, %c8_i32_43 : i32
      %116 = tpu.assume_multiple %115, 8 : i32
      %117 = arith.index_cast %116 : i32 to index
      %c0_44 = arith.constant 0 : index
      %118 = vector.load %arg9[%117, %c0_44] : memref<64x512xf32, #tpu.memory_space<vmem>>, vector<8x512xf32>
      %c0_45 = arith.constant 0 : index
      %c0_46 = arith.constant 0 : index
      %119 = vector.load %arg3[%c0_45, %c0_46] : memref<128x512xf32, #tpu.memory_space<vmem>>, vector<128x512xf32>
      %cst_47 = arith.constant dense<0.000000e+00> : vector<8x512xf32>
      %120 = tpu.matmul %114, %119, %cst_47 {dimension_numbers = #tpu.dot_dimension_numbers<[1], [0], [0], [1], [0, 0, 1, 1], [], []>} : vector<8x128xf32>, vector<128x512xf32>, vector<8x512xf32> -> vector<8x512xf32>
      %121 = arith.addf %118, %120 : vector<8x512xf32>
      %122 = vector.extract_strided_slice %121 {offsets = [0, 0], sizes = [8, 128], strides = [1, 1]} : vector<8x512xf32> to vector<8x128xf32>
      %123 = arith.negf %122 : vector<8x128xf32>
      %124 = math.exp %123 : vector<8x128xf32>
      %cst_48 = arith.constant 1.000000e+00 : f32
      %125 = vector.broadcast %cst_48 : f32 to vector<8x128xf32>
      %126 = arith.addf %125, %124 : vector<8x128xf32>
      %127 = arith.divf %125, %126 : vector<8x128xf32>
      %128 = vector.extract_strided_slice %121 {offsets = [0, 128], sizes = [8, 128], strides = [1, 1]} : vector<8x512xf32> to vector<8x128xf32>
      %129 = arith.negf %128 : vector<8x128xf32>
      %130 = math.exp %129 : vector<8x128xf32>
      %cst_49 = arith.constant 1.000000e+00 : f32
      %131 = vector.broadcast %cst_49 : f32 to vector<8x128xf32>
      %132 = arith.addf %131, %130 : vector<8x128xf32>
      %133 = arith.divf %131, %132 : vector<8x128xf32>
      %134 = vector.extract_strided_slice %121 {offsets = [0, 256], sizes = [8, 128], strides = [1, 1]} : vector<8x512xf32> to vector<8x128xf32>
      %135 = math.tanh %134 : vector<8x128xf32>
      %136 = vector.extract_strided_slice %121 {offsets = [0, 384], sizes = [8, 128], strides = [1, 1]} : vector<8x512xf32> to vector<8x128xf32>
      %137 = arith.negf %136 : vector<8x128xf32>
      %138 = math.exp %137 : vector<8x128xf32>
      %cst_50 = arith.constant 1.000000e+00 : f32
      %139 = vector.broadcast %cst_50 : f32 to vector<8x128xf32>
      %140 = arith.addf %139, %138 : vector<8x128xf32>
      %141 = arith.divf %139, %140 : vector<8x128xf32>
      %142 = arith.mulf %133, %112 : vector<8x128xf32>
      %143 = arith.mulf %127, %135 : vector<8x128xf32>
      %144 = arith.addf %142, %143 : vector<8x128xf32>
      %145 = math.tanh %144 : vector<8x128xf32>
      %146 = arith.mulf %141, %145 : vector<8x128xf32>
      %c4_i32 = arith.constant 4 : i32
      %c8_i32_51 = arith.constant 8 : i32
      %147 = arith.muli %c4_i32, %c8_i32_51 : i32
      %148 = tpu.assume_multiple %147, 8 : i32
      %149 = arith.index_cast %148 : i32 to index
      %c0_52 = arith.constant 0 : index
      %150 = vector.load %arg9[%149, %c0_52] : memref<64x512xf32, #tpu.memory_space<vmem>>, vector<8x512xf32>
      %c0_53 = arith.constant 0 : index
      %c0_54 = arith.constant 0 : index
      %151 = vector.load %arg3[%c0_53, %c0_54] : memref<128x512xf32, #tpu.memory_space<vmem>>, vector<128x512xf32>
      %cst_55 = arith.constant dense<0.000000e+00> : vector<8x512xf32>
      %152 = tpu.matmul %146, %151, %cst_55 {dimension_numbers = #tpu.dot_dimension_numbers<[1], [0], [0], [1], [0, 0, 1, 1], [], []>} : vector<8x128xf32>, vector<128x512xf32>, vector<8x512xf32> -> vector<8x512xf32>
      %153 = arith.addf %150, %152 : vector<8x512xf32>
      %154 = vector.extract_strided_slice %153 {offsets = [0, 0], sizes = [8, 128], strides = [1, 1]} : vector<8x512xf32> to vector<8x128xf32>
      %155 = arith.negf %154 : vector<8x128xf32>
      %156 = math.exp %155 : vector<8x128xf32>
      %cst_56 = arith.constant 1.000000e+00 : f32
      %157 = vector.broadcast %cst_56 : f32 to vector<8x128xf32>
      %158 = arith.addf %157, %156 : vector<8x128xf32>
      %159 = arith.divf %157, %158 : vector<8x128xf32>
      %160 = vector.extract_strided_slice %153 {offsets = [0, 128], sizes = [8, 128], strides = [1, 1]} : vector<8x512xf32> to vector<8x128xf32>
      %161 = arith.negf %160 : vector<8x128xf32>
      %162 = math.exp %161 : vector<8x128xf32>
      %cst_57 = arith.constant 1.000000e+00 : f32
      %163 = vector.broadcast %cst_57 : f32 to vector<8x128xf32>
      %164 = arith.addf %163, %162 : vector<8x128xf32>
      %165 = arith.divf %163, %164 : vector<8x128xf32>
      %166 = vector.extract_strided_slice %153 {offsets = [0, 256], sizes = [8, 128], strides = [1, 1]} : vector<8x512xf32> to vector<8x128xf32>
      %167 = math.tanh %166 : vector<8x128xf32>
      %168 = vector.extract_strided_slice %153 {offsets = [0, 384], sizes = [8, 128], strides = [1, 1]} : vector<8x512xf32> to vector<8x128xf32>
      %169 = arith.negf %168 : vector<8x128xf32>
      %170 = math.exp %169 : vector<8x128xf32>
      %cst_58 = arith.constant 1.000000e+00 : f32
      %171 = vector.broadcast %cst_58 : f32 to vector<8x128xf32>
      %172 = arith.addf %171, %170 : vector<8x128xf32>
      %173 = arith.divf %171, %172 : vector<8x128xf32>
      %174 = arith.mulf %165, %144 : vector<8x128xf32>
      %175 = arith.mulf %159, %167 : vector<8x128xf32>
      %176 = arith.addf %174, %175 : vector<8x128xf32>
      %177 = math.tanh %176 : vector<8x128xf32>
      %178 = arith.mulf %173, %177 : vector<8x128xf32>
      %c5_i32 = arith.constant 5 : i32
      %c8_i32_59 = arith.constant 8 : i32
      %179 = arith.muli %c5_i32, %c8_i32_59 : i32
      %180 = tpu.assume_multiple %179, 8 : i32
      %181 = arith.index_cast %180 : i32 to index
      %c0_60 = arith.constant 0 : index
      %182 = vector.load %arg9[%181, %c0_60] : memref<64x512xf32, #tpu.memory_space<vmem>>, vector<8x512xf32>
      %c0_61 = arith.constant 0 : index
      %c0_62 = arith.constant 0 : index
      %183 = vector.load %arg3[%c0_61, %c0_62] : memref<128x512xf32, #tpu.memory_space<vmem>>, vector<128x512xf32>
      %cst_63 = arith.constant dense<0.000000e+00> : vector<8x512xf32>
      %184 = tpu.matmul %178, %183, %cst_63 {dimension_numbers = #tpu.dot_dimension_numbers<[1], [0], [0], [1], [0, 0, 1, 1], [], []>} : vector<8x128xf32>, vector<128x512xf32>, vector<8x512xf32> -> vector<8x512xf32>
      %185 = arith.addf %182, %184 : vector<8x512xf32>
      %186 = vector.extract_strided_slice %185 {offsets = [0, 0], sizes = [8, 128], strides = [1, 1]} : vector<8x512xf32> to vector<8x128xf32>
      %187 = arith.negf %186 : vector<8x128xf32>
      %188 = math.exp %187 : vector<8x128xf32>
      %cst_64 = arith.constant 1.000000e+00 : f32
      %189 = vector.broadcast %cst_64 : f32 to vector<8x128xf32>
      %190 = arith.addf %189, %188 : vector<8x128xf32>
      %191 = arith.divf %189, %190 : vector<8x128xf32>
      %192 = vector.extract_strided_slice %185 {offsets = [0, 128], sizes = [8, 128], strides = [1, 1]} : vector<8x512xf32> to vector<8x128xf32>
      %193 = arith.negf %192 : vector<8x128xf32>
      %194 = math.exp %193 : vector<8x128xf32>
      %cst_65 = arith.constant 1.000000e+00 : f32
      %195 = vector.broadcast %cst_65 : f32 to vector<8x128xf32>
      %196 = arith.addf %195, %194 : vector<8x128xf32>
      %197 = arith.divf %195, %196 : vector<8x128xf32>
      %198 = vector.extract_strided_slice %185 {offsets = [0, 256], sizes = [8, 128], strides = [1, 1]} : vector<8x512xf32> to vector<8x128xf32>
      %199 = math.tanh %198 : vector<8x128xf32>
      %200 = vector.extract_strided_slice %185 {offsets = [0, 384], sizes = [8, 128], strides = [1, 1]} : vector<8x512xf32> to vector<8x128xf32>
      %201 = arith.negf %200 : vector<8x128xf32>
      %202 = math.exp %201 : vector<8x128xf32>
      %cst_66 = arith.constant 1.000000e+00 : f32
      %203 = vector.broadcast %cst_66 : f32 to vector<8x128xf32>
      %204 = arith.addf %203, %202 : vector<8x128xf32>
      %205 = arith.divf %203, %204 : vector<8x128xf32>
      %206 = arith.mulf %197, %176 : vector<8x128xf32>
      %207 = arith.mulf %191, %199 : vector<8x128xf32>
      %208 = arith.addf %206, %207 : vector<8x128xf32>
      %209 = math.tanh %208 : vector<8x128xf32>
      %210 = arith.mulf %205, %209 : vector<8x128xf32>
      %c6_i32 = arith.constant 6 : i32
      %c8_i32_67 = arith.constant 8 : i32
      %211 = arith.muli %c6_i32, %c8_i32_67 : i32
      %212 = tpu.assume_multiple %211, 8 : i32
      %213 = arith.index_cast %212 : i32 to index
      %c0_68 = arith.constant 0 : index
      %214 = vector.load %arg9[%213, %c0_68] : memref<64x512xf32, #tpu.memory_space<vmem>>, vector<8x512xf32>
      %c0_69 = arith.constant 0 : index
      %c0_70 = arith.constant 0 : index
      %215 = vector.load %arg3[%c0_69, %c0_70] : memref<128x512xf32, #tpu.memory_space<vmem>>, vector<128x512xf32>
      %cst_71 = arith.constant dense<0.000000e+00> : vector<8x512xf32>
      %216 = tpu.matmul %210, %215, %cst_71 {dimension_numbers = #tpu.dot_dimension_numbers<[1], [0], [0], [1], [0, 0, 1, 1], [], []>} : vector<8x128xf32>, vector<128x512xf32>, vector<8x512xf32> -> vector<8x512xf32>
      %217 = arith.addf %214, %216 : vector<8x512xf32>
      %218 = vector.extract_strided_slice %217 {offsets = [0, 0], sizes = [8, 128], strides = [1, 1]} : vector<8x512xf32> to vector<8x128xf32>
      %219 = arith.negf %218 : vector<8x128xf32>
      %220 = math.exp %219 : vector<8x128xf32>
      %cst_72 = arith.constant 1.000000e+00 : f32
      %221 = vector.broadcast %cst_72 : f32 to vector<8x128xf32>
      %222 = arith.addf %221, %220 : vector<8x128xf32>
      %223 = arith.divf %221, %222 : vector<8x128xf32>
      %224 = vector.extract_strided_slice %217 {offsets = [0, 128], sizes = [8, 128], strides = [1, 1]} : vector<8x512xf32> to vector<8x128xf32>
      %225 = arith.negf %224 : vector<8x128xf32>
      %226 = math.exp %225 : vector<8x128xf32>
      %cst_73 = arith.constant 1.000000e+00 : f32
      %227 = vector.broadcast %cst_73 : f32 to vector<8x128xf32>
      %228 = arith.addf %227, %226 : vector<8x128xf32>
      %229 = arith.divf %227, %228 : vector<8x128xf32>
      %230 = vector.extract_strided_slice %217 {offsets = [0, 256], sizes = [8, 128], strides = [1, 1]} : vector<8x512xf32> to vector<8x128xf32>
      %231 = math.tanh %230 : vector<8x128xf32>
      %232 = vector.extract_strided_slice %217 {offsets = [0, 384], sizes = [8, 128], strides = [1, 1]} : vector<8x512xf32> to vector<8x128xf32>
      %233 = arith.negf %232 : vector<8x128xf32>
      %234 = math.exp %233 : vector<8x128xf32>
      %cst_74 = arith.constant 1.000000e+00 : f32
      %235 = vector.broadcast %cst_74 : f32 to vector<8x128xf32>
      %236 = arith.addf %235, %234 : vector<8x128xf32>
      %237 = arith.divf %235, %236 : vector<8x128xf32>
      %238 = arith.mulf %229, %208 : vector<8x128xf32>
      %239 = arith.mulf %223, %231 : vector<8x128xf32>
      %240 = arith.addf %238, %239 : vector<8x128xf32>
      %241 = math.tanh %240 : vector<8x128xf32>
      %242 = arith.mulf %237, %241 : vector<8x128xf32>
      %c7_i32 = arith.constant 7 : i32
      %c8_i32_75 = arith.constant 8 : i32
      %243 = arith.muli %c7_i32, %c8_i32_75 : i32
      %244 = tpu.assume_multiple %243, 8 : i32
      %245 = arith.index_cast %244 : i32 to index
      %c0_76 = arith.constant 0 : index
      %246 = vector.load %arg9[%245, %c0_76] : memref<64x512xf32, #tpu.memory_space<vmem>>, vector<8x512xf32>
      %c0_77 = arith.constant 0 : index
      %c0_78 = arith.constant 0 : index
      %247 = vector.load %arg3[%c0_77, %c0_78] : memref<128x512xf32, #tpu.memory_space<vmem>>, vector<128x512xf32>
      %cst_79 = arith.constant dense<0.000000e+00> : vector<8x512xf32>
      %248 = tpu.matmul %242, %247, %cst_79 {dimension_numbers = #tpu.dot_dimension_numbers<[1], [0], [0], [1], [0, 0, 1, 1], [], []>} : vector<8x128xf32>, vector<128x512xf32>, vector<8x512xf32> -> vector<8x512xf32>
      %249 = arith.addf %246, %248 : vector<8x512xf32>
      %250 = vector.extract_strided_slice %249 {offsets = [0, 0], sizes = [8, 128], strides = [1, 1]} : vector<8x512xf32> to vector<8x128xf32>
      %251 = arith.negf %250 : vector<8x128xf32>
      %252 = math.exp %251 : vector<8x128xf32>
      %cst_80 = arith.constant 1.000000e+00 : f32
      %253 = vector.broadcast %cst_80 : f32 to vector<8x128xf32>
      %254 = arith.addf %253, %252 : vector<8x128xf32>
      %255 = arith.divf %253, %254 : vector<8x128xf32>
      %256 = vector.extract_strided_slice %249 {offsets = [0, 128], sizes = [8, 128], strides = [1, 1]} : vector<8x512xf32> to vector<8x128xf32>
      %257 = arith.negf %256 : vector<8x128xf32>
      %258 = math.exp %257 : vector<8x128xf32>
      %cst_81 = arith.constant 1.000000e+00 : f32
      %259 = vector.broadcast %cst_81 : f32 to vector<8x128xf32>
      %260 = arith.addf %259, %258 : vector<8x128xf32>
      %261 = arith.divf %259, %260 : vector<8x128xf32>
      %262 = vector.extract_strided_slice %249 {offsets = [0, 256], sizes = [8, 128], strides = [1, 1]} : vector<8x512xf32> to vector<8x128xf32>
      %263 = math.tanh %262 : vector<8x128xf32>
      %264 = vector.extract_strided_slice %249 {offsets = [0, 384], sizes = [8, 128], strides = [1, 1]} : vector<8x512xf32> to vector<8x128xf32>
      %265 = arith.negf %264 : vector<8x128xf32>
      %266 = math.exp %265 : vector<8x128xf32>
      %cst_82 = arith.constant 1.000000e+00 : f32
      %267 = vector.broadcast %cst_82 : f32 to vector<8x128xf32>
      %268 = arith.addf %267, %266 : vector<8x128xf32>
      %269 = arith.divf %267, %268 : vector<8x128xf32>
      %270 = arith.mulf %261, %240 : vector<8x128xf32>
      %271 = arith.mulf %255, %263 : vector<8x128xf32>
      %272 = arith.addf %270, %271 : vector<8x128xf32>
      %273 = math.tanh %272 : vector<8x128xf32>
      %274 = arith.mulf %269, %273 : vector<8x128xf32>
      %c8_i32_83 = arith.constant 8 : i32
      %275 = arith.truncf %274 : vector<8x128xf32> to vector<8x128xbf16>
      %c0_84 = arith.constant 0 : index
      %c0_85 = arith.constant 0 : index
      %276 = vector.load %arg8[%c0_84, %c0_85] : memref<8x128xbf16, #tpu.memory_space<vmem>>, vector<8x128xbf16>
      tpu.vector_store %arg8[%c0_84, %c0_85], %275 {strides = array<i32>} : memref<8x128xbf16, #tpu.memory_space<vmem>>, vector<8x128xbf16>,
    } else {
    }
    %c0 = arith.constant 0 : index
    %c0_1 = arith.constant 0 : index
    %3 = vector.load %arg8[%c0, %c0_1] : memref<8x128xbf16, #tpu.memory_space<vmem>>, vector<8x128xbf16>
    %c0_2 = arith.constant 0 : index
    %c0_3 = arith.constant 0 : index
    %4 = vector.load %arg5[%c0_2, %c0_3] : memref<128x128xbf16, #tpu.memory_space<vmem>>, vector<128x128xbf16>
    %cst = arith.constant dense<0.000000e+00> : vector<8x128xf32>
    %5 = tpu.matmul %3, %4, %cst {dimension_numbers = #tpu.dot_dimension_numbers<[1], [0], [0], [1], [0, 0, 1, 1], [], []>} : vector<8x128xbf16>, vector<128x128xbf16>, vector<8x128xf32> -> vector<8x128xf32>
    %c0_4 = arith.constant 0 : index
    %c0_5 = arith.constant 0 : index
    %6 = vector.load %arg6[%c0_4, %c0_5] : memref<1x128xf32, #tpu.memory_space<vmem>>, vector<1x128xf32>
    %7 = vector.broadcast %6 : vector<1x128xf32> to vector<8x128xf32>
    %8 = arith.addf %5, %7 : vector<8x128xf32>
    %c0_6 = arith.constant 0 : index
    %c0_7 = arith.constant 0 : index
    %9 = vector.load %arg7[%c0_6, %c0_7] : memref<8x128xf32, #tpu.memory_space<vmem>>, vector<8x128xf32>
    tpu.vector_store %arg7[%c0_6, %c0_7], %8 {strides = array<i32>} : memref<8x128xf32, #tpu.memory_space<vmem>>, vector<8x128xf32>,
    return
  }
  func.func @transform_0(%arg0: i32) -> (i32, i32) {
    %c0_i32 = arith.constant 0 : i32
    %c0_i32_0 = arith.constant 0 : i32
    %c0_i32_1 = arith.constant 0 : i32
    return %c0_i32, %c0_i32_0 : i32, i32
  }
  func.func @transform_1(%arg0: i32) -> (i32, i32) {
    %c0_i32 = arith.constant 0 : i32
    %c0_i32_0 = arith.constant 0 : i32
    %c0_i32_1 = arith.constant 0 : i32
    return %c0_i32, %c0_i32_0 : i32, i32
  }
  func.func @transform_2(%arg0: i32) -> (i32, i32) {
    %c0_i32 = arith.constant 0 : i32
    %c0_i32_0 = arith.constant 0 : i32
    %c0_i32_1 = arith.constant 0 : i32
    return %c0_i32, %c0_i32_0 : i32, i32
  }
  func.func @transform_3(%arg0: i32) -> (i32, i32) {
    %c0_i32 = arith.constant 0 : i32
    %c0_i32_0 = arith.constant 0 : i32
    %c0_i32_1 = arith.constant 0 : i32
    return %c0_i32, %c0_i32_0 : i32, i32
  }
  func.func @transform_4(%arg0: i32) -> (i32, i32) {
    %c0_i32 = arith.constant 0 : i32
    %c0_i32_0 = arith.constant 0 : i32
    return %c0_i32, %arg0 : i32, i32
  }
  func.func @transform_5(%arg0: i32) -> (i32, i32) {
    %c0_i32 = arith.constant 0 : i32
    %c0_i32_0 = arith.constant 0 : i32
    return %c0_i32, %arg0 : i32, i32
  }
  func.func @transform_6(%arg0: i32) -> (i32, i32) {
    %c0_i32 = arith.constant 0 : i32
    %c0_i32_0 = arith.constant 0 : i32
    return %c0_i32, %arg0 : i32, i32
  }
}

</mosaic_0001>

<llo_original>
// kernel: tpu_custom_call.1
$region0: #{tpu_custom_call.1}
  #allocation0 [shape = 'u32[]', space=smem, size = 0x4, offset = 0x4, fixed_abs, tag = 'smem constant byte address 0x4 - core index']
  #allocation1 [shape = 'u32[144,128]{1,0:T(1,128)}', space=vmem, size = 0x12000, scoped, tag = 'internal scratch']
  #allocation2 [shape = 'bf16[8,128]{1,0:T(8,128)(2,1)}', space=vmem, size = 0x800, scoped, tag = 'scratch operand']
  #allocation3 [shape = 'f32[64,512]{1,0:T(8,128)}', space=vmem, size = 0x20000, scoped, tag = 'scratch operand']
  %s0 = inlined_call_operand.vmem [shape: bf16[64,16], index: 0, kind: input, shape index: {}]
  %s1 = inlined_call_operand.vmem [shape: bf16[16,512], index: 1, kind: input, shape index: {}]
  %s2 = inlined_call_operand.hbm [shape: f32[128,512], index: 2, kind: input, shape index: {}]
  %s3 = inlined_call_operand.vmem [shape: f32[1,512], index: 3, kind: input, shape index: {}]
  %s4 = inlined_call_operand.hbm [shape: bf16[128,128], index: 4, kind: input, shape index: {}]
  %s5 = inlined_call_operand.vmem [shape: f32[1,128], index: 5, kind: input, shape index: {}]
  %s6 = inlined_call_operand.hbm [shape: f32[8,128], index: 6, kind: output, shape index: {}]
  %s7 = sld [smem:[#allocation0]]
  $region46: #{tpu_custom_call.1} parent=0
    _
  %s9 = ssub.s32 1, %s7
  %s10 = scalar_select 0, %s9, %s7
  $region1: #{tpu_custom_call.1} parent=0
    #allocation4 [shape = 'u8[262144]{0}', space=vmem, size = 0x40000, scoped, tag = 'input window, operand 2, single buffered']
    #allocation5 [shape = 's32[1]{0}', space=sflag, size = 0x4, scoped, tag = 'scoped memory for tpu_custom_call.1']
    #allocation6 [shape = 's32[1]{0}', space=sflag, size = 0x4, scoped, tag = 'scoped memory for tpu_custom_call.1']
    #allocation7 [shape = 'u8[32768]{0}', space=vmem, size = 0x8000, scoped, tag = 'input window, operand 4, single buffered']
    #allocation8 [shape = 's32[1]{0}', space=sflag, size = 0x4, scoped, tag = 'scoped memory for tpu_custom_call.1']
    #allocation9 [shape = 'u8[4096]{0}', space=vmem, size = 0x1000, scoped, tag = 'output window, operand 0, single buffered']
    %11 = vsyncpa [#allocation5], 0
    %12 = vsyncpa [#allocation8], 0
    %13 = vsyncpa [#allocation6], 0
    // Predicated region
    $region2: #{tpu_custom_call.1} parent=1 // pred_check
      _
    $region3: #{tpu_custom_call.1} parent=1 // pred_check_branch
      %15 = sbr.rel (0) target = $region5
    $region4: #{tpu_custom_call.1} parent=1 // pred_region
      _
    $region5: #{tpu_custom_call.1} parent=1 // pred_fallthru
      _
    // Predicated region
    $region6: #{tpu_custom_call.1} parent=1 // pred_check
      _
    $region7: #{tpu_custom_call.1} parent=1 // pred_check_branch
      %17 = sbr.rel (0) target = $region9
    $region8: #{tpu_custom_call.1} parent=1 // pred_region
      _
    $region9: #{tpu_custom_call.1} parent=1 // pred_fallthru
      _
    // Predicated region
    $region10: #{tpu_custom_call.1} parent=1 // pred_check
      _
    $region11: #{tpu_custom_call.1} parent=1 // pred_check_branch
      %19 = sbr.rel (0) target = $region13
    $region12: #{tpu_custom_call.1} parent=1 // pred_region
      %s21 = ssub.s32 8192, 8192
      %22 = vsyncadd [#allocation5], %s21
      %s23 = sshll.u32 [#allocation4], 4
      %s24 = int_to_ptr.vmem [resolvable:$true] %s23
      %29 = dma.hbm_to_vmem [thread:$0]  %s2, 8192, %s24, [#allocation5], 512, 512, 32
    $region13: #{tpu_custom_call.1} parent=1 // pred_fallthru
      _
    // Predicated region
    $region14: #{tpu_custom_call.1} parent=1 // pred_check
      _
    $region15: #{tpu_custom_call.1} parent=1 // pred_check_branch
      %31 = sbr.rel (0) target = $region17
    $region16: #{tpu_custom_call.1} parent=1 // pred_region
      _
    $region17: #{tpu_custom_call.1} parent=1 // pred_fallthru
      _
    // Predicated region
    $region18: #{tpu_custom_call.1} parent=1 // pred_check
      _
    $region19: #{tpu_custom_call.1} parent=1 // pred_check_branch
      %33 = sbr.rel (0) target = $region21
    $region20: #{tpu_custom_call.1} parent=1 // pred_region
      %s35 = ssub.s32 1024, 1024
      %36 = vsyncadd [#allocation8], %s35
      %s37 = sshll.u32 [#allocation7], 4
      %s38 = int_to_ptr.vmem [resolvable:$true] %s37
      %43 = dma.hbm_to_vmem [thread:$0]  %s4, 1024, %s38, [#allocation8], 64, 64, 4
    $region21: #{tpu_custom_call.1} parent=1 // pred_fallthru
      _
    // Predicated region
    $region22: #{tpu_custom_call.1} parent=1 // pred_check
      _
    $region23: #{tpu_custom_call.1} parent=1 // pred_check_branch
      %45 = sbr.rel (0) target = $region25
    $region24: #{tpu_custom_call.1} parent=1 // pred_region
      _
    $region25: #{tpu_custom_call.1} parent=1 // pred_fallthru
      _
    // Predicated region
    $region26: #{tpu_custom_call.1} parent=1 // pred_check
      _
    $region27: #{tpu_custom_call.1} parent=1 // pred_check_branch
      %47 = sbr.rel (0) target = $region29
    $region28: #{tpu_custom_call.1} parent=1 // pred_region
      %48 = dma.done [#allocation5], 8192
    $region29: #{tpu_custom_call.1} parent=1 // pred_fallthru
      _
    // Predicated region
    $region30: #{tpu_custom_call.1} parent=1 // pred_check
      _
    $region31: #{tpu_custom_call.1} parent=1 // pred_check_branch
      %50 = sbr.rel (0) target = $region33
    $region32: #{tpu_custom_call.1} parent=1 // pred_region
      %51 = dma.done [#allocation8], 1024
    $region33: #{tpu_custom_call.1} parent=1 // pred_fallthru
      _
    %p53 = scmp.eq.s32.totalorder 0, 0
    // Predicated region
    $region34: #{tpu_custom_call.1} parent=1 // pred_check
      %p54 = pneg %p53
    $region35: #{tpu_custom_call.1} parent=1 // pred_check_branch
      %56 = sbr.rel (%p54) target = $region37
    $region36: #{tpu_custom_call.1} parent=1 // pred_region
      %v57 = vld [vmem:[%s0] sm:$0xf]
      %v58 = vld [vmem:[%s0 + $0x4] sm:$0xf]
      %v59 = vld [vmem:[%s0 + $0x8] sm:$0xf]
      %v60 = vld [vmem:[%s0 + $0xc] sm:$0xf]
      %v61 = vld [vmem:[%s0 + $0x10] sm:$0xf]
      %v62 = vld [vmem:[%s0 + $0x14] sm:$0xf]
      %v63 = vld [vmem:[%s0 + $0x18] sm:$0xf]
      %v64 = vld [vmem:[%s0 + $0x1c] sm:$0xf]
      %v65 = vld [vmem:[%s1] sm:$0xff]
      %v66 = vld [vmem:[%s1 + $0x8] sm:$0xff]
      %v67 = vld [vmem:[%s1 + $0x10] sm:$0xff]
      %v68 = vld [vmem:[%s1 + $0x18] sm:$0xff]
      %v69 = vld [vmem:[%s3] sm:$0xf]
      %v71 = vlaneseq
      %v72 = vshrl.u32 %v71, 7
      %v73 = vsub.s32 0, %v72
      %v74 = vrot.slane %v69, %v73
      %v75 = vlaneseq
      %v76 = vshrl.u32 %v75, 7
      %v77 = vsub.s32 1, %v76
      %v78 = vrot.slane %v69, %v77
      %v79 = vlaneseq
      %v80 = vshrl.u32 %v79, 7
      %v81 = vsub.s32 2, %v80
      %v82 = vrot.slane %v69, %v81
      %v83 = vlaneseq
      %v84 = vshrl.u32 %v83, 7
      %v85 = vsub.s32 3, %v84
      %v86 = vrot.slane %v69, %v85
      %v99 = vunpack.c.l.b16 %v57
      %v100 = vunpack.c.l.b16 %v58
      %v101 = vunpack.c.l.b16 %v59
      %v102 = vunpack.c.l.b16 %v60
      %v103 = vunpack.c.l.b16 %v61
      %v104 = vunpack.c.l.b16 %v62
      %v105 = vunpack.c.l.b16 %v63
      %v106 = vunpack.c.l.b16 %v64
      %v107 = vpack.c.b16 %v100, %v99
      %v108 = vpack.c.b16 %v102, %v101
      %v109 = vpack.c.b16 %v104, %v103
      %v110 = vpack.c.b16 %v106, %v105
      %v115 = vunpack.c.l.b16 %v65
      %v116 = vunpack.c.h.b16 %v65
      %v117 = vunpack.c.l.b16 %v66
      %v118 = vunpack.c.h.b16 %v66
      %v119 = vunpack.c.l.b16 %v67
      %v120 = vunpack.c.h.b16 %v67
      %v121 = vunpack.c.l.b16 %v68
      %v122 = vunpack.c.h.b16 %v68
      %v123 = vpack.c.b16 %v119, %v115
      %v124 = vpack.c.b16 %v120, %v116
      %v125 = vpack.c.b16 %v121, %v117
      %v126 = vpack.c.b16 %v122, %v118
      %vm131 = vcmask 130048
      %v133 = vsel %vm131, %v107, 0
      %v136 = vsel %vm131, %v108, 0
      %v139 = vsel %vm131, %v109, 0
      %v142 = vsel %vm131, %v110, 0
      %144 = vmatprep.subr.bf16.mxu0 0
      %145 = vmatpush1.bf16.msra.mxu0 0
      %146 = vmatprep.subr.bf16.mxu0 0
      %147 = vmatpush1.bf16.msra.mxu0 0
      %148 = vmatprep.subr.bf16.mxu0 0
      %149 = vmatpush1.bf16.msra.mxu0 0
      %150 = vmatprep.subr.bf16.mxu0 0
      %151 = vmatpush1.bf16.msra.mxu0 0
      %152 = vmatprep.subr.bf16.mxu0 0
      %153 = vmatpush1.bf16.msra.mxu0 0
      %154 = vmatprep.subr.bf16.mxu0 0
      %155 = vmatpush1.bf16.msra.mxu0 0
      %156 = vmatprep.subr.bf16.mxu0 0
      %157 = vmatpush1.bf16.msra.mxu0 0
      %158 = vmatprep.subr.bf16.mxu0 %v124
      %159 = vmatpush1.bf16.msra.mxu0 %v123
      %160 = vmatprep.subr.bf16.mxu0 0
      %161 = vmatpush2.bf16.msra.mxu0 0
      %162 = vmatprep.subr.bf16.mxu0 0
      %163 = vmatpush2.bf16.msra.mxu0 0
      %164 = vmatprep.subr.bf16.mxu0 0
      %165 = vmatpush2.bf16.msra.mxu0 0
      %166 = vmatprep.subr.bf16.mxu0 0
      %167 = vmatpush2.bf16.msra.mxu0 0
      %168 = vmatprep.subr.bf16.mxu0 0
      %169 = vmatpush2.bf16.msra.mxu0 0
      %170 = vmatprep.subr.bf16.mxu0 0
      %171 = vmatpush2.bf16.msra.mxu0 0
      %172 = vmatprep.subr.bf16.mxu0 0
      %173 = vmatpush2.bf16.msra.mxu0 0
      %174 = vmatprep.subr.bf16.mxu0 0
      %175 = vmatpush2.bf16.msra.mxu0 0
      %176 = vmatprep.mubr.bf16.mxu0 0
      %177 = vmatmul.mubr.bf16.gmra.mxu0 %v133
      %v178 = vpop.f32.mrf.mxu0
      %v179 = vadd.f32 %v74, %v178
      %v180 = vpop.f32.mrf.mxu0
      %v181 = vadd.f32 %v78, %v180
      %v182 = vpop.f32.mrf.mxu0
      %v183 = vadd.f32 %v74, %v182
      %v184 = vpop.f32.mrf.mxu0
      %v185 = vadd.f32 %v78, %v184
      %186 = vmatprep.mubr.bf16.mxu0 0
      %187 = vmatmul.mubr.bf16.gmra.mxu0 %v136
      %v188 = vpop.f32.mrf.mxu0
      %v189 = vadd.f32 %v74, %v188
      %v190 = vpop.f32.mrf.mxu0
      %v191 = vadd.f32 %v78, %v190
      %v192 = vpop.f32.mrf.mxu0
      %v193 = vadd.f32 %v74, %v192
      %v194 = vpop.f32.mrf.mxu0
      %v195 = vadd.f32 %v78, %v194
      %196 = vmatprep.mubr.bf16.mxu0 0
      %197 = vmatmul.mubr.bf16.gmra.mxu0 %v139
      %v198 = vpop.f32.mrf.mxu0
      %v199 = vadd.f32 %v74, %v198
      %v200 = vpop.f32.mrf.mxu0
      %v201 = vadd.f32 %v78, %v200
      %v202 = vpop.f32.mrf.mxu0
      %v203 = vadd.f32 %v74, %v202
      %v204 = vpop.f32.mrf.mxu0
      %v205 = vadd.f32 %v78, %v204
      %206 = vmatprep.mubr.bf16.mxu0 0
      %207 = vmatmul.mubr.bf16.gmra.mxu0 %v142
      %v208 = vpop.f32.mrf.mxu0
      %v209 = vadd.f32 %v74, %v208
      %v210 = vpop.f32.mrf.mxu0
      %v211 = vadd.f32 %v78, %v210
      %v212 = vpop.f32.mrf.mxu0
      %v213 = vadd.f32 %v74, %v212
      %v214 = vpop.f32.mrf.mxu0
      %v215 = vadd.f32 %v78, %v214
      %216 = vdwg.mxu0
      %217 = vmatprep.subr.bf16.mxu0 0
      %218 = vmatpush1.bf16.msra.mxu0 0
      %219 = vmatprep.subr.bf16.mxu0 0
      %220 = vmatpush1.bf16.msra.mxu0 0
      %221 = vmatprep.subr.bf16.mxu0 0
      %222 = vmatpush1.bf16.msra.mxu0 0
      %223 = vmatprep.subr.bf16.mxu0 0
      %224 = vmatpush1.bf16.msra.mxu0 0
      %225 = vmatprep.subr.bf16.mxu0 0
      %226 = vmatpush1.bf16.msra.mxu0 0
      %227 = vmatprep.subr.bf16.mxu0 0
      %228 = vmatpush1.bf16.msra.mxu0 0
      %229 = vmatprep.subr.bf16.mxu0 0
      %230 = vmatpush1.bf16.msra.mxu0 0
      %231 = vmatprep.subr.bf16.mxu0 %v126
      %232 = vmatpush1.bf16.msra.mxu0 %v125
      %233 = vmatprep.subr.bf16.mxu0 0
      %234 = vmatpush2.bf16.msra.mxu0 0
      %235 = vmatprep.subr.bf16.mxu0 0
      %236 = vmatpush2.bf16.msra.mxu0 0
      %237 = vmatprep.subr.bf16.mxu0 0
      %238 = vmatpush2.bf16.msra.mxu0 0
      %239 = vmatprep.subr.bf16.mxu0 0
      %240 = vmatpush2.bf16.msra.mxu0 0
      %241 = vmatprep.subr.bf16.mxu0 0
      %242 = vmatpush2.bf16.msra.mxu0 0
      %243 = vmatprep.subr.bf16.mxu0 0
      %244 = vmatpush2.bf16.msra.mxu0 0
      %245 = vmatprep.subr.bf16.mxu0 0
      %246 = vmatpush2.bf16.msra.mxu0 0
      %247 = vmatprep.subr.bf16.mxu0 0
      %248 = vmatpush2.bf16.msra.mxu0 0
      %249 = vmatprep.mubr.bf16.mxu0 0
      %250 = vmatmul.mubr.bf16.gmra.mxu0 %v133
      %v251 = vpop.f32.mrf.mxu0
      %v252 = vadd.f32 %v82, %v251
      %v253 = vpop.f32.mrf.mxu0
      %v254 = vadd.f32 %v86, %v253
      %v255 = vpop.f32.mrf.mxu0
      %v256 = vadd.f32 %v82, %v255
      %v257 = vpop.f32.mrf.mxu0
      %v258 = vadd.f32 %v86, %v257
      %259 = vmatprep.mubr.bf16.mxu0 0
      %260 = vmatmul.mubr.bf16.gmra.mxu0 %v136
      %v261 = vpop.f32.mrf.mxu0
      %v262 = vadd.f32 %v82, %v261
      %v263 = vpop.f32.mrf.mxu0
      %v264 = vadd.f32 %v86, %v263
      %v265 = vpop.f32.mrf.mxu0
      %v266 = vadd.f32 %v82, %v265
      %v267 = vpop.f32.mrf.mxu0
      %v268 = vadd.f32 %v86, %v267
      %269 = vmatprep.mubr.bf16.mxu0 0
      %270 = vmatmul.mubr.bf16.gmra.mxu0 %v139
      %v271 = vpop.f32.mrf.mxu0
      %v272 = vadd.f32 %v82, %v271
      %v273 = vpop.f32.mrf.mxu0
      %v274 = vadd.f32 %v86, %v273
      %v275 = vpop.f32.mrf.mxu0
      %v276 = vadd.f32 %v82, %v275
      %v277 = vpop.f32.mrf.mxu0
      %v278 = vadd.f32 %v86, %v277
      %279 = vmatprep.mubr.bf16.mxu0 0
      %280 = vmatmul.mubr.bf16.gmra.mxu0 %v142
      %v281 = vpop.f32.mrf.mxu0
      %v282 = vadd.f32 %v82, %v281
      %v283 = vpop.f32.mrf.mxu0
      %v284 = vadd.f32 %v86, %v283
      %v285 = vpop.f32.mrf.mxu0
      %v286 = vadd.f32 %v82, %v285
      %v287 = vpop.f32.mrf.mxu0
      %v288 = vadd.f32 %v86, %v287
      %289 = vdwg.mxu0
      %290 = vst [vmem:[#allocation3] sm:$0xff] %v179
      %291 = vst [vmem:[#allocation3 + $0x8] sm:$0xff] %v181
      %292 = vst [vmem:[#allocation3 + $0x10] sm:$0xff] %v252
      %293 = vst [vmem:[#allocation3 + $0x18] sm:$0xff] %v254
      %294 = vst [vmem:[#allocation3 + $0x20] sm:$0xff] %v183
      %295 = vst [vmem:[#allocation3 + $0x28] sm:$0xff] %v185
      %296 = vst [vmem:[#allocation3 + $0x30] sm:$0xff] %v256
      %297 = vst [vmem:[#allocation3 + $0x38] sm:$0xff] %v258
      %298 = vst [vmem:[#allocation3 + $0x40] sm:$0xff] %v189
      %299 = vst [vmem:[#allocation3 + $0x48] sm:$0xff] %v191
      %300 = vst [vmem:[#allocation3 + $0x50] sm:$0xff] %v262
      %301 = vst [vmem:[#allocation3 + $0x58] sm:$0xff] %v264
      %302 = vst [vmem:[#allocation3 + $0x60] sm:$0xff] %v193
      %303 = vst [vmem:[#allocation3 + $0x68] sm:$0xff] %v195
      %304 = vst [vmem:[#allocation3 + $0x70] sm:$0xff] %v266
      %305 = vst [vmem:[#allocation3 + $0x78] sm:$0xff] %v268
      %306 = vst [vmem:[#allocation3 + $0x80] sm:$0xff] %v199
      %307 = vst [vmem:[#allocation3 + $0x88] sm:$0xff] %v201
      %308 = vst [vmem:[#allocation3 + $0x90] sm:$0xff] %v272
      %309 = vst [vmem:[#allocation3 + $0x98] sm:$0xff] %v274
      %310 = vst [vmem:[#allocation3 + $0xa0] sm:$0xff] %v203
      %311 = vst [vmem:[#allocation3 + $0xa8] sm:$0xff] %v205
      %312 = vst [vmem:[#allocation3 + $0xb0] sm:$0xff] %v276
      %313 = vst [vmem:[#allocation3 + $0xb8] sm:$0xff] %v278
      %314 = vst [vmem:[#allocation3 + $0xc0] sm:$0xff] %v209
      %315 = vst [vmem:[#allocation3 + $0xc8] sm:$0xff] %v211
      %316 = vst [vmem:[#allocation3 + $0xd0] sm:$0xff] %v282
      %317 = vst [vmem:[#allocation3 + $0xd8] sm:$0xff] %v284
      %318 = vst [vmem:[#allocation3 + $0xe0] sm:$0xff] %v213
      %319 = vst [vmem:[#allocation3 + $0xe8] sm:$0xff] %v215
      %320 = vst [vmem:[#allocation3 + $0xf0] sm:$0xff] %v286
      %321 = vst [vmem:[#allocation3 + $0xf8] sm:$0xff] %v288
      %s322 = smul.u32 0, 4
      %s323 = smul.addr %s322, 8
      %s324 = scalar_lea.vmem [#allocation3], %s323
      %v325 = vld [vmem:[%s324] sm:$0xff]
      %v326 = vld [vmem:[%s324 + $0x8] sm:$0xff]
      %v327 = vld [vmem:[%s324 + $0x10] sm:$0xff]
      %v328 = vld [vmem:[%s324 + $0x18] sm:$0xff]
      %v329 = vld [vmem:[#allocation4] sm:$0xff]
      %v330 = vld [vmem:[#allocation4 + $0x8] sm:$0xff]
      %v331 = vld [vmem:[#allocation4 + $0x10] sm:$0xff]
      %v332 = vld [vmem:[#allocation4 + $0x18] sm:$0xff]
      %v333 = vld [vmem:[#allocation4 + $0x20] sm:$0xff]
      %v334 = vld [vmem:[#allocation4 + $0x28] sm:$0xff]
      %v335 = vld [vmem:[#allocation4 + $0x30] sm:$0xff]
      %v336 = vld [vmem:[#allocation4 + $0x38] sm:$0xff]
      %v337 = vld [vmem:[#allocation4 + $0x40] sm:$0xff]
      %v338 = vld [vmem:[#allocation4 + $0x48] sm:$0xff]
      %v339 = vld [vmem:[#allocation4 + $0x50] sm:$0xff]
      %v340 = vld [vmem:[#allocation4 + $0x58] sm:$0xff]
      %v341 = vld [vmem:[#allocation4 + $0x60] sm:$0xff]
      %v342 = vld [vmem:[#allocation4 + $0x68] sm:$0xff]
      %v343 = vld [vmem:[#allocation4 + $0x70] sm:$0xff]
      %v344 = vld [vmem:[#allocation4 + $0x78] sm:$0xff]
      %v345 = vld [vmem:[#allocation4 + $0x80] sm:$0xff]
      %v346 = vld [vmem:[#allocation4 + $0x88] sm:$0xff]
      %v347 = vld [vmem:[#allocation4 + $0x90] sm:$0xff]
      %v348 = vld [vmem:[#allocation4 + $0x98] sm:$0xff]
      %v349 = vld [vmem:[#allocation4 + $0xa0] sm:$0xff]
      %v350 = vld [vmem:[#allocation4 + $0xa8] sm:$0xff]
      %v351 = vld [vmem:[#allocation4 + $0xb0] sm:$0xff]
      %v352 = vld [vmem:[#allocation4 + $0xb8] sm:$0xff]
      %v353 = vld [vmem:[#allocation4 + $0xc0] sm:$0xff]
      %v354 = vld [vmem:[#allocation4 + $0xc8] sm:$0xff]
      %v355 = vld [vmem:[#allocation4 + $0xd0] sm:$0xff]
      %v356 = vld [vmem:[#allocation4 + $0xd8] sm:$0xff]
      %v357 = vld [vmem:[#allocation4 + $0xe0] sm:$0xff]
      %v358 = vld [vmem:[#allocation4 + $0xe8] sm:$0xff]
      %v359 = vld [vmem:[#allocation4 + $0xf0] sm:$0xff]
      %v360 = vld [vmem:[#allocation4 + $0xf8] sm:$0xff]
      %v361 = vld [vmem:[#allocation4 + $0x100] sm:$0xff]
      %v362 = vld [vmem:[#allocation4 + $0x108] sm:$0xff]
      %v363 = vld [vmem:[#allocation4 + $0x110] sm:$0xff]
      %v364 = vld [vmem:[#allocation4 + $0x118] sm:$0xff]
      %v365 = vld [vmem:[#allocation4 + $0x120] sm:$0xff]
      %v366 = vld [vmem:[#allocation4 + $0x128] sm:$0xff]
      %v367 = vld [vmem:[#allocation4 + $0x130] sm:$0xff]
      %v368 = vld [vmem:[#allocation4 + $0x138] sm:$0xff]
      %v369 = vld [vmem:[#allocation4 + $0x140] sm:$0xff]
      %v370 = vld [vmem:[#allocation4 + $0x148] sm:$0xff]
      %v371 = vld [vmem:[#allocation4 + $0x150] sm:$0xff]
      %v372 = vld [vmem:[#allocation4 + $0x158] sm:$0xff]
      %v373 = vld [vmem:[#allocation4 + $0x160] sm:$0xff]
      %v374 = vld [vmem:[#allocation4 + $0x168] sm:$0xff]
      %v375 = vld [vmem:[#allocation4 + $0x170] sm:$0xff]
      %v376 = vld [vmem:[#allocation4 + $0x178] sm:$0xff]
      %v377 = vld [vmem:[#allocation4 + $0x180] sm:$0xff]
      %v378 = vld [vmem:[#allocation4 + $0x188] sm:$0xff]
      %v379 = vld [vmem:[#allocation4 + $0x190] sm:$0xff]
      %v380 = vld [vmem:[#allocation4 + $0x198] sm:$0xff]
      %v381 = vld [vmem:[#allocation4 + $0x1a0] sm:$0xff]
      %v382 = vld [vmem:[#allocation4 + $0x1a8] sm:$0xff]
      %v383 = vld [vmem:[#allocation4 + $0x1b0] sm:$0xff]
      %v384 = vld [vmem:[#allocation4 + $0x1b8] sm:$0xff]
      %v385 = vld [vmem:[#allocation4 + $0x1c0] sm:$0xff]
      %v386 = vld [vmem:[#allocation4 + $0x1c8] sm:$0xff]
      %v387 = vld [vmem:[#allocation4 + $0x1d0] sm:$0xff]
      %v388 = vld [vmem:[#allocation4 + $0x1d8] sm:$0xff]
      %v389 = vld [vmem:[#allocation4 + $0x1e0] sm:$0xff]
      %v390 = vld [vmem:[#allocation4 + $0x1e8] sm:$0xff]
      %v391 = vld [vmem:[#allocation4 + $0x1f0] sm:$0xff]
      %v392 = vld [vmem:[#allocation4 + $0x1f8] sm:$0xff]
      %393 = vmatprep.subr.mxu0 %v390
      %394 = vmatpush1.msra.mxu0 %v389
      %395 = vmatprep.subr.mxu0 %v386
      %396 = vmatpush1.msra.mxu0 %v385
      %397 = vmatprep.subr.mxu0 %v382
      %398 = vmatpush1.msra.mxu0 %v381
      %399 = vmatprep.subr.mxu0 %v378
      %400 = vmatpush1.msra.mxu0 %v377
      %401 = vmatprep.subr.mxu0 %v374
      %402 = vmatpush1.msra.mxu0 %v373
      %403 = vmatprep.subr.mxu0 %v370
      %404 = vmatpush1.msra.mxu0 %v369
      %405 = vmatprep.subr.mxu0 %v366
      %406 = vmatpush1.msra.mxu0 %v365
      %407 = vmatprep.subr.mxu0 %v362
      %408 = vmatpush1.msra.mxu0 %v361
      %409 = vmatprep.subr.mxu0 %v358
      %410 = vmatpush1.msra.mxu0 %v357
      %411 = vmatprep.subr.mxu0 %v354
      %412 = vmatpush1.msra.mxu0 %v353
      %413 = vmatprep.subr.mxu0 %v350
      %414 = vmatpush1.msra.mxu0 %v349
      %415 = vmatprep.subr.mxu0 %v346
      %416 = vmatpush1.msra.mxu0 %v345
      %417 = vmatprep.subr.mxu0 %v342
      %418 = vmatpush1.msra.mxu0 %v341
      %419 = vmatprep.subr.mxu0 %v338
      %420 = vmatpush1.msra.mxu0 %v337
      %421 = vmatprep.subr.mxu0 %v334
      %422 = vmatpush1.msra.mxu0 %v333
      %423 = vmatprep.subr.mxu0 %v330
      %424 = vmatpush1.msra.mxu0 %v329
      %425 = vmatprep.subr.mxu0 0.0
      %426 = vmatpush2.msra.mxu0 0.0
      %427 = vmatprep.subr.mxu0 0.0
      %428 = vmatpush2.msra.mxu0 0.0
      %429 = vmatprep.subr.mxu0 0.0
      %430 = vmatpush2.msra.mxu0 0.0
      %431 = vmatprep.subr.mxu0 0.0
      %432 = vmatpush2.msra.mxu0 0.0
      %433 = vmatprep.subr.mxu0 0.0
      %434 = vmatpush2.msra.mxu0 0.0
      %435 = vmatprep.subr.mxu0 0.0
      %436 = vmatpush2.msra.mxu0 0.0
      %437 = vmatprep.subr.mxu0 0.0
      %438 = vmatpush2.msra.mxu0 0.0
      %439 = vmatprep.subr.mxu0 0.0
      %440 = vmatpush2.msra.mxu0 0.0
      %441 = vmatprep.subr.mxu0 0.0
      %442 = vmatpush2.msra.mxu0 0.0
      %443 = vmatprep.subr.mxu0 0.0
      %444 = vmatpush2.msra.mxu0 0.0
      %445 = vmatprep.subr.mxu0 0.0
      %446 = vmatpush2.msra.mxu0 0.0
      %447 = vmatprep.subr.mxu0 0.0
      %448 = vmatpush2.msra.mxu0 0.0
      %449 = vmatprep.subr.mxu0 0.0
      %450 = vmatpush2.msra.mxu0 0.0
      %451 = vmatprep.subr.mxu0 0.0
      %452 = vmatpush2.msra.mxu0 0.0
      %453 = vmatprep.subr.mxu0 0.0
      %454 = vmatpush2.msra.mxu0 0.0
      %455 = vmatprep.subr.mxu0 0.0
      %456 = vmatpush2.msra.mxu0 0.0
      %457 = vmatprep.mubr.f32.mxu0 0.0
      %458 = vmatmul.mubr.f32.gmra.mxu0 0.0
      %v459 = vpop.f32.mrf.mxu0
      %v460 = vadd.f32 0.0, %v459
      %v461 = vpop.f32.mrf.mxu0
      %v462 = vadd.f32 0.0, %v461
      %463 = vdwg.mxu0
      %464 = vmatprep.subr.mxu0 %v392
      %465 = vmatpush1.msra.mxu0 %v391
      %466 = vmatprep.subr.mxu0 %v388
      %467 = vmatpush1.msra.mxu0 %v387
      %468 = vmatprep.subr.mxu0 %v384
      %469 = vmatpush1.msra.mxu0 %v383
      %470 = vmatprep.subr.mxu0 %v380
      %471 = vmatpush1.msra.mxu0 %v379
      %472 = vmatprep.subr.mxu0 %v376
      %473 = vmatpush1.msra.mxu0 %v375
      %474 = vmatprep.subr.mxu0 %v372
      %475 = vmatpush1.msra.mxu0 %v371
      %476 = vmatprep.subr.mxu0 %v368
      %477 = vmatpush1.msra.mxu0 %v367
      %478 = vmatprep.subr.mxu0 %v364
      %479 = vmatpush1.msra.mxu0 %v363
      %480 = vmatprep.subr.mxu0 %v360
      %481 = vmatpush1.msra.mxu0 %v359
      %482 = vmatprep.subr.mxu0 %v356
      %483 = vmatpush1.msra.mxu0 %v355
      %484 = vmatprep.subr.mxu0 %v352
      %485 = vmatpush1.msra.mxu0 %v351
      %486 = vmatprep.subr.mxu0 %v348
      %487 = vmatpush1.msra.mxu0 %v347
      %488 = vmatprep.subr.mxu0 %v344
      %489 = vmatpush1.msra.mxu0 %v343
      %490 = vmatprep.subr.mxu0 %v340
      %491 = vmatpush1.msra.mxu0 %v339
      %492 = vmatprep.subr.mxu0 %v336
      %493 = vmatpush1.msra.mxu0 %v335
      %494 = vmatprep.subr.mxu0 %v332
      %495 = vmatpush1.msra.mxu0 %v331
      %496 = vmatprep.subr.mxu0 0.0
      %497 = vmatpush2.msra.mxu0 0.0
      %498 = vmatprep.subr.mxu0 0.0
      %499 = vmatpush2.msra.mxu0 0.0
      %500 = vmatprep.subr.mxu0 0.0
      %501 = vmatpush2.msra.mxu0 0.0
      %502 = vmatprep.subr.mxu0 0.0
      %503 = vmatpush2.msra.mxu0 0.0
      %504 = vmatprep.subr.mxu0 0.0
      %505 = vmatpush2.msra.mxu0 0.0
      %506 = vmatprep.subr.mxu0 0.0
      %507 = vmatpush2.msra.mxu0 0.0
      %508 = vmatprep.subr.mxu0 0.0
      %509 = vmatpush2.msra.mxu0 0.0
      %510 = vmatprep.subr.mxu0 0.0
      %511 = vmatpush2.msra.mxu0 0.0
      %512 = vmatprep.subr.mxu0 0.0
      %513 = vmatpush2.msra.mxu0 0.0
      %514 = vmatprep.subr.mxu0 0.0
      %515 = vmatpush2.msra.mxu0 0.0
      %516 = vmatprep.subr.mxu0 0.0
      %517 = vmatpush2.msra.mxu0 0.0
      %518 = vmatprep.subr.mxu0 0.0
      %519 = vmatpush2.msra.mxu0 0.0
      %520 = vmatprep.subr.mxu0 0.0
      %521 = vmatpush2.msra.mxu0 0.0
      %522 = vmatprep.subr.mxu0 0.0
      %523 = vmatpush2.msra.mxu0 0.0
      %524 = vmatprep.subr.mxu0 0.0
      %525 = vmatpush2.msra.mxu0 0.0
      %526 = vmatprep.subr.mxu0 0.0
      %527 = vmatpush2.msra.mxu0 0.0
      %528 = vmatprep.mubr.f32.mxu0 0.0
      %529 = vmatmul.mubr.f32.gmra.mxu0 0.0
      %v530 = vpop.f32.mrf.mxu0
      %v531 = vadd.f32 0.0, %v530
      %v532 = vpop.f32.mrf.mxu0
      %v533 = vadd.f32 0.0, %v532
      %534 = vdwg.mxu0
      %v535 = vadd.f32 %v325, %v460
      %v536 = vadd.f32 %v326, %v462
      %v537 = vadd.f32 %v327, %v531
      %v538 = vadd.f32 %v328, %v533
      %v539 = vxor.u32 %v535, 2147483648
      %v540 = vmul.f32 %v539, 1.442695
      %v541 = vpow.pop %v540
      %v542 = vadd.f32 %v541, 1.0
      %v543 = vrcp.pop %v542
      %v544 = vmul.f32 1.0, %v543
      %v545 = vxor.u32 %v536, 2147483648
      %v546 = vmul.f32 %v545, 1.442695
      %v547 = vpow.pop %v546
      %v548 = vadd.f32 %v547, 1.0
      %v549 = vrcp.pop %v548
      %v550 = vmul.f32 1.0, %v549
      %v551 = vtanh.pop %v537
      %v552 = vxor.u32 %v538, 2147483648
      %v553 = vmul.f32 %v552, 1.442695
      %v554 = vpow.pop %v553
      %v555 = vadd.f32 %v554, 1.0
      %v556 = vrcp.pop %v555
      %v557 = vmul.f32 1.0, %v556
      %v558 = vmul.f32 %v550, 0.0
      %v559 = vmul.f32 %v544, %v551
      %v560 = vadd.f32 %v558, %v559
      %v561 = vtanh.pop %v560
      %v562 = vmul.f32 %v557, %v561
      %s563 = smul.u32 1, 4
      %s564 = smul.addr %s563, 8
      %s565 = scalar_lea.vmem [#allocation3], %s564
      %v566 = vld [vmem:[%s565] sm:$0xff]
      %v567 = vld [vmem:[%s565 + $0x8] sm:$0xff]
      %v568 = vld [vmem:[%s565 + $0x10] sm:$0xff]
      %v569 = vld [vmem:[%s565 + $0x18] sm:$0xff]
      %570 = vmatprep.subr.mxu0 %v390
      %571 = vmatpush1.msra.mxu0 %v389
      %572 = vmatprep.subr.mxu0 %v386
      %573 = vmatpush1.msra.mxu0 %v385
      %574 = vmatprep.subr.mxu0 %v382
      %575 = vmatpush1.msra.mxu0 %v381
      %576 = vmatprep.subr.mxu0 %v378
      %577 = vmatpush1.msra.mxu0 %v377
      %578 = vmatprep.subr.mxu0 %v374
      %579 = vmatpush1.msra.mxu0 %v373
      %580 = vmatprep.subr.mxu0 %v370
      %581 = vmatpush1.msra.mxu0 %v369
      %582 = vmatprep.subr.mxu0 %v366
      %583 = vmatpush1.msra.mxu0 %v365
      %584 = vmatprep.subr.mxu0 %v362
      %585 = vmatpush1.msra.mxu0 %v361
      %586 = vmatprep.subr.mxu0 %v358
      %587 = vmatpush1.msra.mxu0 %v357
      %588 = vmatprep.subr.mxu0 %v354
      %589 = vmatpush1.msra.mxu0 %v353
      %590 = vmatprep.subr.mxu0 %v350
      %591 = vmatpush1.msra.mxu0 %v349
      %592 = vmatprep.subr.mxu0 %v346
      %593 = vmatpush1.msra.mxu0 %v345
      %594 = vmatprep.subr.mxu0 %v342
      %595 = vmatpush1.msra.mxu0 %v341
      %596 = vmatprep.subr.mxu0 %v338
      %597 = vmatpush1.msra.mxu0 %v337
      %598 = vmatprep.subr.mxu0 %v334
      %599 = vmatpush1.msra.mxu0 %v333
      %600 = vmatprep.subr.mxu0 %v330
      %601 = vmatpush1.msra.mxu0 %v329
      %602 = vmatprep.subr.mxu0 0.0
      %603 = vmatpush2.msra.mxu0 0.0
      %604 = vmatprep.subr.mxu0 0.0
      %605 = vmatpush2.msra.mxu0 0.0
      %606 = vmatprep.subr.mxu0 0.0
      %607 = vmatpush2.msra.mxu0 0.0
      %608 = vmatprep.subr.mxu0 0.0
      %609 = vmatpush2.msra.mxu0 0.0
      %610 = vmatprep.subr.mxu0 0.0
      %611 = vmatpush2.msra.mxu0 0.0
      %612 = vmatprep.subr.mxu0 0.0
      %613 = vmatpush2.msra.mxu0 0.0
      %614 = vmatprep.subr.mxu0 0.0
      %615 = vmatpush2.msra.mxu0 0.0
      %616 = vmatprep.subr.mxu0 0.0
      %617 = vmatpush2.msra.mxu0 0.0
      %618 = vmatprep.subr.mxu0 0.0
      %619 = vmatpush2.msra.mxu0 0.0
      %620 = vmatprep.subr.mxu0 0.0
      %621 = vmatpush2.msra.mxu0 0.0
      %622 = vmatprep.subr.mxu0 0.0
      %623 = vmatpush2.msra.mxu0 0.0
      %624 = vmatprep.subr.mxu0 0.0
      %625 = vmatpush2.msra.mxu0 0.0
      %626 = vmatprep.subr.mxu0 0.0
      %627 = vmatpush2.msra.mxu0 0.0
      %628 = vmatprep.subr.mxu0 0.0
      %629 = vmatpush2.msra.mxu0 0.0
      %630 = vmatprep.subr.mxu0 0.0
      %631 = vmatpush2.msra.mxu0 0.0
      %632 = vmatprep.subr.mxu0 0.0
      %633 = vmatpush2.msra.mxu0 0.0
      %634 = vmatprep.mubr.f32.mxu0 0.0
      %635 = vmatmul.mubr.f32.gmra.mxu0 %v562
      %v636 = vpop.f32.mrf.mxu0
      %v637 = vadd.f32 0.0, %v636
      %v638 = vpop.f32.mrf.mxu0
      %v639 = vadd.f32 0.0, %v638
      %640 = vdwg.mxu0
      %641 = vmatprep.subr.mxu0 %v392
      %642 = vmatpush1.msra.mxu0 %v391
      %643 = vmatprep.subr.mxu0 %v388
      %644 = vmatpush1.msra.mxu0 %v387
      %645 = vmatprep.subr.mxu0 %v384
      %646 = vmatpush1.msra.mxu0 %v383
      %647 = vmatprep.subr.mxu0 %v380
      %648 = vmatpush1.msra.mxu0 %v379
      %649 = vmatprep.subr.mxu0 %v376
      %650 = vmatpush1.msra.mxu0 %v375
      %651 = vmatprep.subr.mxu0 %v372
      %652 = vmatpush1.msra.mxu0 %v371
      %653 = vmatprep.subr.mxu0 %v368
      %654 = vmatpush1.msra.mxu0 %v367
      %655 = vmatprep.subr.mxu0 %v364
      %656 = vmatpush1.msra.mxu0 %v363
      %657 = vmatprep.subr.mxu0 %v360
      %658 = vmatpush1.msra.mxu0 %v359
      %659 = vmatprep.subr.mxu0 %v356
      %660 = vmatpush1.msra.mxu0 %v355
      %661 = vmatprep.subr.mxu0 %v352
      %662 = vmatpush1.msra.mxu0 %v351
      %663 = vmatprep.subr.mxu0 %v348
      %664 = vmatpush1.msra.mxu0 %v347
      %665 = vmatprep.subr.mxu0 %v344
      %666 = vmatpush1.msra.mxu0 %v343
      %667 = vmatprep.subr.mxu0 %v340
      %668 = vmatpush1.msra.mxu0 %v339
      %669 = vmatprep.subr.mxu0 %v336
      %670 = vmatpush1.msra.mxu0 %v335
      %671 = vmatprep.subr.mxu0 %v332
      %672 = vmatpush1.msra.mxu0 %v331
      %673 = vmatprep.subr.mxu0 0.0
      %674 = vmatpush2.msra.mxu0 0.0
      %675 = vmatprep.subr.mxu0 0.0
      %676 = vmatpush2.msra.mxu0 0.0
      %677 = vmatprep.subr.mxu0 0.0
      %678 = vmatpush2.msra.mxu0 0.0
      %679 = vmatprep.subr.mxu0 0.0
      %680 = vmatpush2.msra.mxu0 0.0
      %681 = vmatprep.subr.mxu0 0.0
      %682 = vmatpush2.msra.mxu0 0.0
      %683 = vmatprep.subr.mxu0 0.0
      %684 = vmatpush2.msra.mxu0 0.0
      %685 = vmatprep.subr.mxu0 0.0
      %686 = vmatpush2.msra.mxu0 0.0
      %687 = vmatprep.subr.mxu0 0.0
      %688 = vmatpush2.msra.mxu0 0.0
      %689 = vmatprep.subr.mxu0 0.0
      %690 = vmatpush2.msra.mxu0 0.0
      %691 = vmatprep.subr.mxu0 0.0
      %692 = vmatpush2.msra.mxu0 0.0
      %693 = vmatprep.subr.mxu0 0.0
      %694 = vmatpush2.msra.mxu0 0.0
      %695 = vmatprep.subr.mxu0 0.0
      %696 = vmatpush2.msra.mxu0 0.0
      %697 = vmatprep.subr.mxu0 0.0
      %698 = vmatpush2.msra.mxu0 0.0
      %699 = vmatprep.subr.mxu0 0.0
      %700 = vmatpush2.msra.mxu0 0.0
      %701 = vmatprep.subr.mxu0 0.0
      %702 = vmatpush2.msra.mxu0 0.0
      %703 = vmatprep.subr.mxu0 0.0
      %704 = vmatpush2.msra.mxu0 0.0
      %705 = vmatprep.mubr.f32.mxu0 0.0
      %706 = vmatmul.mubr.f32.gmra.mxu0 %v562
      %v707 = vpop.f32.mrf.mxu0
      %v708 = vadd.f32 0.0, %v707
      %v709 = vpop.f32.mrf.mxu0
      %v710 = vadd.f32 0.0, %v709
      %711 = vdwg.mxu0
      %v712 = vadd.f32 %v566, %v637
      %v713 = vadd.f32 %v567, %v639
      %v714 = vadd.f32 %v568, %v708
      %v715 = vadd.f32 %v569, %v710
      %v716 = vxor.u32 %v712, 2147483648
      %v717 = vmul.f32 %v716, 1.442695
      %v718 = vpow.pop %v717
      %v719 = vadd.f32 %v718, 1.0
      %v720 = vrcp.pop %v719
      %v721 = vmul.f32 1.0, %v720
      %v722 = vxor.u32 %v713, 2147483648
      %v723 = vmul.f32 %v722, 1.442695
      %v724 = vpow.pop %v723
      %v725 = vadd.f32 %v724, 1.0
      %v726 = vrcp.pop %v725
      %v727 = vmul.f32 1.0, %v726
      %v728 = vtanh.pop %v714
      %v729 = vxor.u32 %v715, 2147483648
      %v730 = vmul.f32 %v729, 1.442695
      %v731 = vpow.pop %v730
      %v732 = vadd.f32 %v731, 1.0
      %v733 = vrcp.pop %v732
      %v734 = vmul.f32 1.0, %v733
      %v735 = vmul.f32 %v727, %v560
      %v736 = vmul.f32 %v721, %v728
      %v737 = vadd.f32 %v735, %v736
      %v738 = vtanh.pop %v737
      %v739 = vmul.f32 %v734, %v738
      %s740 = smul.u32 2, 4
      %s741 = smul.addr %s740, 8
      %s742 = scalar_lea.vmem [#allocation3], %s741
      %v743 = vld [vmem:[%s742] sm:$0xff]
      %v744 = vld [vmem:[%s742 + $0x8] sm:$0xff]
      %v745 = vld [vmem:[%s742 + $0x10] sm:$0xff]
      %v746 = vld [vmem:[%s742 + $0x18] sm:$0xff]
      %747 = vmatprep.subr.mxu0 %v390
      %748 = vmatpush1.msra.mxu0 %v389
      %749 = vmatprep.subr.mxu0 %v386
      %750 = vmatpush1.msra.mxu0 %v385
      %751 = vmatprep.subr.mxu0 %v382
      %752 = vmatpush1.msra.mxu0 %v381
      %753 = vmatprep.subr.mxu0 %v378
      %754 = vmatpush1.msra.mxu0 %v377
      %755 = vmatprep.subr.mxu0 %v374
      %756 = vmatpush1.msra.mxu0 %v373
      %757 = vmatprep.subr.mxu0 %v370
      %758 = vmatpush1.msra.mxu0 %v369
      %759 = vmatprep.subr.mxu0 %v366
      %760 = vmatpush1.msra.mxu0 %v365
      %761 = vmatprep.subr.mxu0 %v362
      %762 = vmatpush1.msra.mxu0 %v361
      %763 = vmatprep.subr.mxu0 %v358
      %764 = vmatpush1.msra.mxu0 %v357
      %765 = vmatprep.subr.mxu0 %v354
      %766 = vmatpush1.msra.mxu0 %v353
      %767 = vmatprep.subr.mxu0 %v350
      %768 = vmatpush1.msra.mxu0 %v349
      %769 = vmatprep.subr.mxu0 %v346
      %770 = vmatpush1.msra.mxu0 %v345
      %771 = vmatprep.subr.mxu0 %v342
      %772 = vmatpush1.msra.mxu0 %v341
      %773 = vmatprep.subr.mxu0 %v338
      %774 = vmatpush1.msra.mxu0 %v337
      %775 = vmatprep.subr.mxu0 %v334
      %776 = vmatpush1.msra.mxu0 %v333
      %777 = vmatprep.subr.mxu0 %v330
      %778 = vmatpush1.msra.mxu0 %v329
      %779 = vmatprep.subr.mxu0 0.0
      %780 = vmatpush2.msra.mxu0 0.0
      %781 = vmatprep.subr.mxu0 0.0
      %782 = vmatpush2.msra.mxu0 0.0
      %783 = vmatprep.subr.mxu0 0.0
      %784 = vmatpush2.msra.mxu0 0.0
      %785 = vmatprep.subr.mxu0 0.0
      %786 = vmatpush2.msra.mxu0 0.0
      %787 = vmatprep.subr.mxu0 0.0
      %788 = vmatpush2.msra.mxu0 0.0
      %789 = vmatprep.subr.mxu0 0.0
      %790 = vmatpush2.msra.mxu0 0.0
      %791 = vmatprep.subr.mxu0 0.0
      %792 = vmatpush2.msra.mxu0 0.0
      %793 = vmatprep.subr.mxu0 0.0
      %794 = vmatpush2.msra.mxu0 0.0
      %795 = vmatprep.subr.mxu0 0.0
      %796 = vmatpush2.msra.mxu0 0.0
      %797 = vmatprep.subr.mxu0 0.0
      %798 = vmatpush2.msra.mxu0 0.0
      %799 = vmatprep.subr.mxu0 0.0
      %800 = vmatpush2.msra.mxu0 0.0
      %801 = vmatprep.subr.mxu0 0.0
      %802 = vmatpush2.msra.mxu0 0.0
      %803 = vmatprep.subr.mxu0 0.0
      %804 = vmatpush2.msra.mxu0 0.0
      %805 = vmatprep.subr.mxu0 0.0
      %806 = vmatpush2.msra.mxu0 0.0
      %807 = vmatprep.subr.mxu0 0.0
      %808 = vmatpush2.msra.mxu0 0.0
      %809 = vmatprep.subr.mxu0 0.0
      %810 = vmatpush2.msra.mxu0 0.0
      %811 = vmatprep.mubr.f32.mxu0 0.0
      %812 = vmatmul.mubr.f32.gmra.mxu0 %v739
      %v813 = vpop.f32.mrf.mxu0
      %v814 = vadd.f32 0.0, %v813
      %v815 = vpop.f32.mrf.mxu0
      %v816 = vadd.f32 0.0, %v815
      %817 = vdwg.mxu0
      %818 = vmatprep.subr.mxu0 %v392
      %819 = vmatpush1.msra.mxu0 %v391
      %820 = vmatprep.subr.mxu0 %v388
      %821 = vmatpush1.msra.mxu0 %v387
      %822 = vmatprep.subr.mxu0 %v384
      %823 = vmatpush1.msra.mxu0 %v383
      %824 = vmatprep.subr.mxu0 %v380
      %825 = vmatpush1.msra.mxu0 %v379
      %826 = vmatprep.subr.mxu0 %v376
      %827 = vmatpush1.msra.mxu0 %v375
      %828 = vmatprep.subr.mxu0 %v372
      %829 = vmatpush1.msra.mxu0 %v371
      %830 = vmatprep.subr.mxu0 %v368
      %831 = vmatpush1.msra.mxu0 %v367
      %832 = vmatprep.subr.mxu0 %v364
      %833 = vmatpush1.msra.mxu0 %v363
      %834 = vmatprep.subr.mxu0 %v360
      %835 = vmatpush1.msra.mxu0 %v359
      %836 = vmatprep.subr.mxu0 %v356
      %837 = vmatpush1.msra.mxu0 %v355
      %838 = vmatprep.subr.mxu0 %v352
      %839 = vmatpush1.msra.mxu0 %v351
      %840 = vmatprep.subr.mxu0 %v348
      %841 = vmatpush1.msra.mxu0 %v347
      %842 = vmatprep.subr.mxu0 %v344
      %843 = vmatpush1.msra.mxu0 %v343
      %844 = vmatprep.subr.mxu0 %v340
      %845 = vmatpush1.msra.mxu0 %v339
      %846 = vmatprep.subr.mxu0 %v336
      %847 = vmatpush1.msra.mxu0 %v335
      %848 = vmatprep.subr.mxu0 %v332
      %849 = vmatpush1.msra.mxu0 %v331
      %850 = vmatprep.subr.mxu0 0.0
      %851 = vmatpush2.msra.mxu0 0.0
      %852 = vmatprep.subr.mxu0 0.0
      %853 = vmatpush2.msra.mxu0 0.0
      %854 = vmatprep.subr.mxu0 0.0
      %855 = vmatpush2.msra.mxu0 0.0
      %856 = vmatprep.subr.mxu0 0.0
      %857 = vmatpush2.msra.mxu0 0.0
      %858 = vmatprep.subr.mxu0 0.0
      %859 = vmatpush2.msra.mxu0 0.0
      %860 = vmatprep.subr.mxu0 0.0
      %861 = vmatpush2.msra.mxu0 0.0
      %862 = vmatprep.subr.mxu0 0.0
      %863 = vmatpush2.msra.mxu0 0.0
      %864 = vmatprep.subr.mxu0 0.0
      %865 = vmatpush2.msra.mxu0 0.0
      %866 = vmatprep.subr.mxu0 0.0
      %867 = vmatpush2.msra.mxu0 0.0
      %868 = vmatprep.subr.mxu0 0.0
      %869 = vmatpush2.msra.mxu0 0.0
      %870 = vmatprep.subr.mxu0 0.0
      %871 = vmatpush2.msra.mxu0 0.0
      %872 = vmatprep.subr.mxu0 0.0
      %873 = vmatpush2.msra.mxu0 0.0
      %874 = vmatprep.subr.mxu0 0.0
      %875 = vmatpush2.msra.mxu0 0.0
      %876 = vmatprep.subr.mxu0 0.0
      %877 = vmatpush2.msra.mxu0 0.0
      %878 = vmatprep.subr.mxu0 0.0
      %879 = vmatpush2.msra.mxu0 0.0
      %880 = vmatprep.subr.mxu0 0.0
      %881 = vmatpush2.msra.mxu0 0.0
      %882 = vmatprep.mubr.f32.mxu0 0.0
      %883 = vmatmul.mubr.f32.gmra.mxu0 %v739
      %v884 = vpop.f32.mrf.mxu0
      %v885 = vadd.f32 0.0, %v884
      %v886 = vpop.f32.mrf.mxu0
      %v887 = vadd.f32 0.0, %v886
      %888 = vdwg.mxu0
      %v889 = vadd.f32 %v743, %v814
      %v890 = vadd.f32 %v744, %v816
      %v891 = vadd.f32 %v745, %v885
      %v892 = vadd.f32 %v746, %v887
      %v893 = vxor.u32 %v889, 2147483648
      %v894 = vmul.f32 %v893, 1.442695
      %v895 = vpow.pop %v894
      %v896 = vadd.f32 %v895, 1.0
      %v897 = vrcp.pop %v896
      %v898 = vmul.f32 1.0, %v897
      %v899 = vxor.u32 %v890, 2147483648
      %v900 = vmul.f32 %v899, 1.442695
      %v901 = vpow.pop %v900
      %v902 = vadd.f32 %v901, 1.0
      %v903 = vrcp.pop %v902
      %v904 = vmul.f32 1.0, %v903
      %v905 = vtanh.pop %v891
      %v906 = vxor.u32 %v892, 2147483648
      %v907 = vmul.f32 %v906, 1.442695
      %v908 = vpow.pop %v907
      %v909 = vadd.f32 %v908, 1.0
      %v910 = vrcp.pop %v909
      %v911 = vmul.f32 1.0, %v910
      %v912 = vmul.f32 %v904, %v737
      %v913 = vmul.f32 %v898, %v905
      %v914 = vadd.f32 %v912, %v913
      %v915 = vtanh.pop %v914
      %v916 = vmul.f32 %v911, %v915
      %s917 = smul.u32 3, 4
      %s918 = smul.addr %s917, 8
      %s919 = scalar_lea.vmem [#allocation3], %s918
      %v920 = vld [vmem:[%s919] sm:$0xff]
      %v921 = vld [vmem:[%s919 + $0x8] sm:$0xff]
      %v922 = vld [vmem:[%s919 + $0x10] sm:$0xff]
      %v923 = vld [vmem:[%s919 + $0x18] sm:$0xff]
      %924 = vmatprep.subr.mxu0 %v390
      %925 = vmatpush1.msra.mxu0 %v389
      %926 = vmatprep.subr.mxu0 %v386
      %927 = vmatpush1.msra.mxu0 %v385
      %928 = vmatprep.subr.mxu0 %v382
      %929 = vmatpush1.msra.mxu0 %v381
      %930 = vmatprep.subr.mxu0 %v378
      %931 = vmatpush1.msra.mxu0 %v377
      %932 = vmatprep.subr.mxu0 %v374
      %933 = vmatpush1.msra.mxu0 %v373
      %934 = vmatprep.subr.mxu0 %v370
      %935 = vmatpush1.msra.mxu0 %v369
      %936 = vmatprep.subr.mxu0 %v366
      %937 = vmatpush1.msra.mxu0 %v365
      %938 = vmatprep.subr.mxu0 %v362
      %939 = vmatpush1.msra.mxu0 %v361
      %940 = vmatprep.subr.mxu0 %v358
      %941 = vmatpush1.msra.mxu0 %v357
      %942 = vmatprep.subr.mxu0 %v354
      %943 = vmatpush1.msra.mxu0 %v353
      %944 = vmatprep.subr.mxu0 %v350
      %945 = vmatpush1.msra.mxu0 %v349
      %946 = vmatprep.subr.mxu0 %v346
      %947 = vmatpush1.msra.mxu0 %v345
      %948 = vmatprep.subr.mxu0 %v342
      %949 = vmatpush1.msra.mxu0 %v341
      %950 = vmatprep.subr.mxu0 %v338
      %951 = vmatpush1.msra.mxu0 %v337
      %952 = vmatprep.subr.mxu0 %v334
      %953 = vmatpush1.msra.mxu0 %v333
      %954 = vmatprep.subr.mxu0 %v330
      %955 = vmatpush1.msra.mxu0 %v329
      %956 = vmatprep.subr.mxu0 0.0
      %957 = vmatpush2.msra.mxu0 0.0
      %958 = vmatprep.subr.mxu0 0.0
      %959 = vmatpush2.msra.mxu0 0.0
      %960 = vmatprep.subr.mxu0 0.0
      %961 = vmatpush2.msra.mxu0 0.0
      %962 = vmatprep.subr.mxu0 0.0
      %963 = vmatpush2.msra.mxu0 0.0
      %964 = vmatprep.subr.mxu0 0.0
      %965 = vmatpush2.msra.mxu0 0.0
      %966 = vmatprep.subr.mxu0 0.0
      %967 = vmatpush2.msra.mxu0 0.0
      %968 = vmatprep.subr.mxu0 0.0
      %969 = vmatpush2.msra.mxu0 0.0
      %970 = vmatprep.subr.mxu0 0.0
      %971 = vmatpush2.msra.mxu0 0.0
      %972 = vmatprep.subr.mxu0 0.0
      %973 = vmatpush2.msra.mxu0 0.0
      %974 = vmatprep.subr.mxu0 0.0
      %975 = vmatpush2.msra.mxu0 0.0
      %976 = vmatprep.subr.mxu0 0.0
      %977 = vmatpush2.msra.mxu0 0.0
      %978 = vmatprep.subr.mxu0 0.0
      %979 = vmatpush2.msra.mxu0 0.0
      %980 = vmatprep.subr.mxu0 0.0
      %981 = vmatpush2.msra.mxu0 0.0
      %982 = vmatprep.subr.mxu0 0.0
      %983 = vmatpush2.msra.mxu0 0.0
      %984 = vmatprep.subr.mxu0 0.0
      %985 = vmatpush2.msra.mxu0 0.0
      %986 = vmatprep.subr.mxu0 0.0
      %987 = vmatpush2.msra.mxu0 0.0
      %988 = vmatprep.mubr.f32.mxu0 0.0
      %989 = vmatmul.mubr.f32.gmra.mxu0 %v916
      %v990 = vpop.f32.mrf.mxu0
      %v991 = vadd.f32 0.0, %v990
      %v992 = vpop.f32.mrf.mxu0
      %v993 = vadd.f32 0.0, %v992
      %994 = vdwg.mxu0
      %995 = vmatprep.subr.mxu0 %v392
      %996 = vmatpush1.msra.mxu0 %v391
      %997 = vmatprep.subr.mxu0 %v388
      %998 = vmatpush1.msra.mxu0 %v387
      %999 = vmatprep.subr.mxu0 %v384
      %1000 = vmatpush1.msra.mxu0 %v383
      %1001 = vmatprep.subr.mxu0 %v380
      %1002 = vmatpush1.msra.mxu0 %v379
      %1003 = vmatprep.subr.mxu0 %v376
      %1004 = vmatpush1.msra.mxu0 %v375
      %1005 = vmatprep.subr.mxu0 %v372
      %1006 = vmatpush1.msra.mxu0 %v371
      %1007 = vmatprep.subr.mxu0 %v368
      %1008 = vmatpush1.msra.mxu0 %v367
      %1009 = vmatprep.subr.mxu0 %v364
      %1010 = vmatpush1.msra.mxu0 %v363
      %1011 = vmatprep.subr.mxu0 %v360
      %1012 = vmatpush1.msra.mxu0 %v359
      %1013 = vmatprep.subr.mxu0 %v356
      %1014 = vmatpush1.msra.mxu0 %v355
      %1015 = vmatprep.subr.mxu0 %v352
      %1016 = vmatpush1.msra.mxu0 %v351
      %1017 = vmatprep.subr.mxu0 %v348
      %1018 = vmatpush1.msra.mxu0 %v347
      %1019 = vmatprep.subr.mxu0 %v344
      %1020 = vmatpush1.msra.mxu0 %v343
      %1021 = vmatprep.subr.mxu0 %v340
      %1022 = vmatpush1.msra.mxu0 %v339
      %1023 = vmatprep.subr.mxu0 %v336
      %1024 = vmatpush1.msra.mxu0 %v335
      %1025 = vmatprep.subr.mxu0 %v332
      %1026 = vmatpush1.msra.mxu0 %v331
      %1027 = vmatprep.subr.mxu0 0.0
      %1028 = vmatpush2.msra.mxu0 0.0
      %1029 = vmatprep.subr.mxu0 0.0
      %1030 = vmatpush2.msra.mxu0 0.0
      %1031 = vmatprep.subr.mxu0 0.0
      %1032 = vmatpush2.msra.mxu0 0.0
      %1033 = vmatprep.subr.mxu0 0.0
      %1034 = vmatpush2.msra.mxu0 0.0
      %1035 = vmatprep.subr.mxu0 0.0
      %1036 = vmatpush2.msra.mxu0 0.0
      %1037 = vmatprep.subr.mxu0 0.0
      %1038 = vmatpush2.msra.mxu0 0.0
      %1039 = vmatprep.subr.mxu0 0.0
      %1040 = vmatpush2.msra.mxu0 0.0
      %1041 = vmatprep.subr.mxu0 0.0
      %1042 = vmatpush2.msra.mxu0 0.0
      %1043 = vmatprep.subr.mxu0 0.0
      %1044 = vmatpush2.msra.mxu0 0.0
      %1045 = vmatprep.subr.mxu0 0.0
      %1046 = vmatpush2.msra.mxu0 0.0
      %1047 = vmatprep.subr.mxu0 0.0
      %1048 = vmatpush2.msra.mxu0 0.0
      %1049 = vmatprep.subr.mxu0 0.0
      %1050 = vmatpush2.msra.mxu0 0.0
      %1051 = vmatprep.subr.mxu0 0.0
      %1052 = vmatpush2.msra.mxu0 0.0
      %1053 = vmatprep.subr.mxu0 0.0
      %1054 = vmatpush2.msra.mxu0 0.0
      %1055 = vmatprep.subr.mxu0 0.0
      %1056 = vmatpush2.msra.mxu0 0.0
      %1057 = vmatprep.subr.mxu0 0.0
      %1058 = vmatpush2.msra.mxu0 0.0
      %1059 = vmatprep.mubr.f32.mxu0 0.0
      %1060 = vmatmul.mubr.f32.gmra.mxu0 %v916
      %v1061 = vpop.f32.mrf.mxu0
      %v1062 = vadd.f32 0.0, %v1061
      %v1063 = vpop.f32.mrf.mxu0
      %v1064 = vadd.f32 0.0, %v1063
      %1065 = vdwg.mxu0
      %v1066 = vadd.f32 %v920, %v991
      %v1067 = vadd.f32 %v921, %v993
      %v1068 = vadd.f32 %v922, %v1062
      %v1069 = vadd.f32 %v923, %v1064
      %v1070 = vxor.u32 %v1066, 2147483648
      %v1071 = vmul.f32 %v1070, 1.442695
      %v1072 = vpow.pop %v1071
      %v1073 = vadd.f32 %v1072, 1.0
      %v1074 = vrcp.pop %v1073
      %v1075 = vmul.f32 1.0, %v1074
      %v1076 = vxor.u32 %v1067, 2147483648
      %v1077 = vmul.f32 %v1076, 1.442695
      %v1078 = vpow.pop %v1077
      %v1079 = vadd.f32 %v1078, 1.0
      %v1080 = vrcp.pop %v1079
      %v1081 = vmul.f32 1.0, %v1080
      %v1082 = vtanh.pop %v1068
      %v1083 = vxor.u32 %v1069, 2147483648
      %v1084 = vmul.f32 %v1083, 1.442695
      %v1085 = vpow.pop %v1084
      %v1086 = vadd.f32 %v1085, 1.0
      %v1087 = vrcp.pop %v1086
      %v1088 = vmul.f32 1.0, %v1087
      %v1089 = vmul.f32 %v1081, %v914
      %v1090 = vmul.f32 %v1075, %v1082
      %v1091 = vadd.f32 %v1089, %v1090
      %v1092 = vtanh.pop %v1091
      %v1093 = vmul.f32 %v1088, %v1092
      %s1094 = smul.u32 4, 4
      %s1095 = smul.addr %s1094, 8
      %s1096 = scalar_lea.vmem [#allocation3], %s1095
      %v1097 = vld [vmem:[%s1096] sm:$0xff]
      %v1098 = vld [vmem:[%s1096 + $0x8] sm:$0xff]
      %v1099 = vld [vmem:[%s1096 + $0x10] sm:$0xff]
      %v1100 = vld [vmem:[%s1096 + $0x18] sm:$0xff]
      %1101 = vmatprep.subr.mxu0 %v390
      %1102 = vmatpush1.msra.mxu0 %v389
      %1103 = vmatprep.subr.mxu0 %v386
      %1104 = vmatpush1.msra.mxu0 %v385
      %1105 = vmatprep.subr.mxu0 %v382
      %1106 = vmatpush1.msra.mxu0 %v381
      %1107 = vmatprep.subr.mxu0 %v378
      %1108 = vmatpush1.msra.mxu0 %v377
      %1109 = vmatprep.subr.mxu0 %v374
      %1110 = vmatpush1.msra.mxu0 %v373
      %1111 = vmatprep.subr.mxu0 %v370
      %1112 = vmatpush1.msra.mxu0 %v369
      %1113 = vmatprep.subr.mxu0 %v366
      %1114 = vmatpush1.msra.mxu0 %v365
      %1115 = vmatprep.subr.mxu0 %v362
      %1116 = vmatpush1.msra.mxu0 %v361
      %1117 = vmatprep.subr.mxu0 %v358
      %1118 = vmatpush1.msra.mxu0 %v357
      %1119 = vmatprep.subr.mxu0 %v354
      %1120 = vmatpush1.msra.mxu0 %v353
      %1121 = vmatprep.subr.mxu0 %v350
      %1122 = vmatpush1.msra.mxu0 %v349
      %1123 = vmatprep.subr.mxu0 %v346
      %1124 = vmatpush1.msra.mxu0 %v345
      %1125 = vmatprep.subr.mxu0 %v342
      %1126 = vmatpush1.msra.mxu0 %v341
      %1127 = vmatprep.subr.mxu0 %v338
      %1128 = vmatpush1.msra.mxu0 %v337
      %1129 = vmatprep.subr.mxu0 %v334
      %1130 = vmatpush1.msra.mxu0 %v333
      %1131 = vmatprep.subr.mxu0 %v330
      %1132 = vmatpush1.msra.mxu0 %v329
      %1133 = vmatprep.subr.mxu0 0.0
      %1134 = vmatpush2.msra.mxu0 0.0
      %1135 = vmatprep.subr.mxu0 0.0
      %1136 = vmatpush2.msra.mxu0 0.0
      %1137 = vmatprep.subr.mxu0 0.0
      %1138 = vmatpush2.msra.mxu0 0.0
      %1139 = vmatprep.subr.mxu0 0.0
      %1140 = vmatpush2.msra.mxu0 0.0
      %1141 = vmatprep.subr.mxu0 0.0
      %1142 = vmatpush2.msra.mxu0 0.0
      %1143 = vmatprep.subr.mxu0 0.0
      %1144 = vmatpush2.msra.mxu0 0.0
      %1145 = vmatprep.subr.mxu0 0.0
      %1146 = vmatpush2.msra.mxu0 0.0
      %1147 = vmatprep.subr.mxu0 0.0
      %1148 = vmatpush2.msra.mxu0 0.0
      %1149 = vmatprep.subr.mxu0 0.0
      %1150 = vmatpush2.msra.mxu0 0.0
      %1151 = vmatprep.subr.mxu0 0.0
      %1152 = vmatpush2.msra.mxu0 0.0
      %1153 = vmatprep.subr.mxu0 0.0
      %1154 = vmatpush2.msra.mxu0 0.0
      %1155 = vmatprep.subr.mxu0 0.0
      %1156 = vmatpush2.msra.mxu0 0.0
      %1157 = vmatprep.subr.mxu0 0.0
      %1158 = vmatpush2.msra.mxu0 0.0
      %1159 = vmatprep.subr.mxu0 0.0
      %1160 = vmatpush2.msra.mxu0 0.0
      %1161 = vmatprep.subr.mxu0 0.0
      %1162 = vmatpush2.msra.mxu0 0.0
      %1163 = vmatprep.subr.mxu0 0.0
      %1164 = vmatpush2.msra.mxu0 0.0
      %1165 = vmatprep.mubr.f32.mxu0 0.0
      %1166 = vmatmul.mubr.f32.gmra.mxu0 %v1093
      %v1167 = vpop.f32.mrf.mxu0
      %v1168 = vadd.f32 0.0, %v1167
      %v1169 = vpop.f32.mrf.mxu0
      %v1170 = vadd.f32 0.0, %v1169
      %1171 = vdwg.mxu0
      %1172 = vmatprep.subr.mxu0 %v392
      %1173 = vmatpush1.msra.mxu0 %v391
      %1174 = vmatprep.subr.mxu0 %v388
      %1175 = vmatpush1.msra.mxu0 %v387
      %1176 = vmatprep.subr.mxu0 %v384
      %1177 = vmatpush1.msra.mxu0 %v383
      %1178 = vmatprep.subr.mxu0 %v380
      %1179 = vmatpush1.msra.mxu0 %v379
      %1180 = vmatprep.subr.mxu0 %v376
      %1181 = vmatpush1.msra.mxu0 %v375
      %1182 = vmatprep.subr.mxu0 %v372
      %1183 = vmatpush1.msra.mxu0 %v371
      %1184 = vmatprep.subr.mxu0 %v368
      %1185 = vmatpush1.msra.mxu0 %v367
      %1186 = vmatprep.subr.mxu0 %v364
      %1187 = vmatpush1.msra.mxu0 %v363
      %1188 = vmatprep.subr.mxu0 %v360
      %1189 = vmatpush1.msra.mxu0 %v359
      %1190 = vmatprep.subr.mxu0 %v356
      %1191 = vmatpush1.msra.mxu0 %v355
      %1192 = vmatprep.subr.mxu0 %v352
      %1193 = vmatpush1.msra.mxu0 %v351
      %1194 = vmatprep.subr.mxu0 %v348
      %1195 = vmatpush1.msra.mxu0 %v347
      %1196 = vmatprep.subr.mxu0 %v344
      %1197 = vmatpush1.msra.mxu0 %v343
      %1198 = vmatprep.subr.mxu0 %v340
      %1199 = vmatpush1.msra.mxu0 %v339
      %1200 = vmatprep.subr.mxu0 %v336
      %1201 = vmatpush1.msra.mxu0 %v335
      %1202 = vmatprep.subr.mxu0 %v332
      %1203 = vmatpush1.msra.mxu0 %v331
      %1204 = vmatprep.subr.mxu0 0.0
      %1205 = vmatpush2.msra.mxu0 0.0
      %1206 = vmatprep.subr.mxu0 0.0
      %1207 = vmatpush2.msra.mxu0 0.0
      %1208 = vmatprep.subr.mxu0 0.0
      %1209 = vmatpush2.msra.mxu0 0.0
      %1210 = vmatprep.subr.mxu0 0.0
      %1211 = vmatpush2.msra.mxu0 0.0
      %1212 = vmatprep.subr.mxu0 0.0
      %1213 = vmatpush2.msra.mxu0 0.0
      %1214 = vmatprep.subr.mxu0 0.0
      %1215 = vmatpush2.msra.mxu0 0.0
      %1216 = vmatprep.subr.mxu0 0.0
      %1217 = vmatpush2.msra.mxu0 0.0
      %1218 = vmatprep.subr.mxu0 0.0
      %1219 = vmatpush2.msra.mxu0 0.0
      %1220 = vmatprep.subr.mxu0 0.0
      %1221 = vmatpush2.msra.mxu0 0.0
      %1222 = vmatprep.subr.mxu0 0.0
      %1223 = vmatpush2.msra.mxu0 0.0
      %1224 = vmatprep.subr.mxu0 0.0
      %1225 = vmatpush2.msra.mxu0 0.0
      %1226 = vmatprep.subr.mxu0 0.0
      %1227 = vmatpush2.msra.mxu0 0.0
      %1228 = vmatprep.subr.mxu0 0.0
      %1229 = vmatpush2.msra.mxu0 0.0
      %1230 = vmatprep.subr.mxu0 0.0
      %1231 = vmatpush2.msra.mxu0 0.0
      %1232 = vmatprep.subr.mxu0 0.0
      %1233 = vmatpush2.msra.mxu0 0.0
      %1234 = vmatprep.subr.mxu0 0.0
      %1235 = vmatpush2.msra.mxu0 0.0
      %1236 = vmatprep.mubr.f32.mxu0 0.0
      %1237 = vmatmul.mubr.f32.gmra.mxu0 %v1093
      %v1238 = vpop.f32.mrf.mxu0
      %v1239 = vadd.f32 0.0, %v1238
      %v1240 = vpop.f32.mrf.mxu0
      %v1241 = vadd.f32 0.0, %v1240
      %1242 = vdwg.mxu0
      %v1243 = vadd.f32 %v1097, %v1168
      %v1244 = vadd.f32 %v1098, %v1170
      %v1245 = vadd.f32 %v1099, %v1239
      %v1246 = vadd.f32 %v1100, %v1241
      %v1247 = vxor.u32 %v1243, 2147483648
      %v1248 = vmul.f32 %v1247, 1.442695
      %v1249 = vpow.pop %v1248
      %v1250 = vadd.f32 %v1249, 1.0
      %v1251 = vrcp.pop %v1250
      %v1252 = vmul.f32 1.0, %v1251
      %v1253 = vxor.u32 %v1244, 2147483648
      %v1254 = vmul.f32 %v1253, 1.442695
      %v1255 = vpow.pop %v1254
      %v1256 = vadd.f32 %v1255, 1.0
      %v1257 = vrcp.pop %v1256
      %v1258 = vmul.f32 1.0, %v1257
      %v1259 = vtanh.pop %v1245
      %v1260 = vxor.u32 %v1246, 2147483648
      %v1261 = vmul.f32 %v1260, 1.442695
      %v1262 = vpow.pop %v1261
      %v1263 = vadd.f32 %v1262, 1.0
      %v1264 = vrcp.pop %v1263
      %v1265 = vmul.f32 1.0, %v1264
      %v1266 = vmul.f32 %v1258, %v1091
      %v1267 = vmul.f32 %v1252, %v1259
      %v1268 = vadd.f32 %v1266, %v1267
      %v1269 = vtanh.pop %v1268
      %v1270 = vmul.f32 %v1265, %v1269
      %s1271 = smul.u32 5, 4
      %s1272 = smul.addr %s1271, 8
      %s1273 = scalar_lea.vmem [#allocation3], %s1272
      %v1274 = vld [vmem:[%s1273] sm:$0xff]
      %v1275 = vld [vmem:[%s1273 + $0x8] sm:$0xff]
      %v1276 = vld [vmem:[%s1273 + $0x10] sm:$0xff]
      %v1277 = vld [vmem:[%s1273 + $0x18] sm:$0xff]
      %1278 = vmatprep.subr.mxu0 %v390
      %1279 = vmatpush1.msra.mxu0 %v389
      %1280 = vmatprep.subr.mxu0 %v386
      %1281 = vmatpush1.msra.mxu0 %v385
      %1282 = vmatprep.subr.mxu0 %v382
      %1283 = vmatpush1.msra.mxu0 %v381
      %1284 = vmatprep.subr.mxu0 %v378
      %1285 = vmatpush1.msra.mxu0 %v377
      %1286 = vmatprep.subr.mxu0 %v374
      %1287 = vmatpush1.msra.mxu0 %v373
      %1288 = vmatprep.subr.mxu0 %v370
      %1289 = vmatpush1.msra.mxu0 %v369
      %1290 = vmatprep.subr.mxu0 %v366
      %1291 = vmatpush1.msra.mxu0 %v365
      %1292 = vmatprep.subr.mxu0 %v362
      %1293 = vmatpush1.msra.mxu0 %v361
      %1294 = vmatprep.subr.mxu0 %v358
      %1295 = vmatpush1.msra.mxu0 %v357
      %1296 = vmatprep.subr.mxu0 %v354
      %1297 = vmatpush1.msra.mxu0 %v353
      %1298 = vmatprep.subr.mxu0 %v350
      %1299 = vmatpush1.msra.mxu0 %v349
      %1300 = vmatprep.subr.mxu0 %v346
      %1301 = vmatpush1.msra.mxu0 %v345
      %1302 = vmatprep.subr.mxu0 %v342
      %1303 = vmatpush1.msra.mxu0 %v341
      %1304 = vmatprep.subr.mxu0 %v338
      %1305 = vmatpush1.msra.mxu0 %v337
      %1306 = vmatprep.subr.mxu0 %v334
      %1307 = vmatpush1.msra.mxu0 %v333
      %1308 = vmatprep.subr.mxu0 %v330
      %1309 = vmatpush1.msra.mxu0 %v329
      %1310 = vmatprep.subr.mxu0 0.0
      %1311 = vmatpush2.msra.mxu0 0.0
      %1312 = vmatprep.subr.mxu0 0.0
      %1313 = vmatpush2.msra.mxu0 0.0
      %1314 = vmatprep.subr.mxu0 0.0
      %1315 = vmatpush2.msra.mxu0 0.0
      %1316 = vmatprep.subr.mxu0 0.0
      %1317 = vmatpush2.msra.mxu0 0.0
      %1318 = vmatprep.subr.mxu0 0.0
      %1319 = vmatpush2.msra.mxu0 0.0
      %1320 = vmatprep.subr.mxu0 0.0
      %1321 = vmatpush2.msra.mxu0 0.0
      %1322 = vmatprep.subr.mxu0 0.0
      %1323 = vmatpush2.msra.mxu0 0.0
      %1324 = vmatprep.subr.mxu0 0.0
      %1325 = vmatpush2.msra.mxu0 0.0
      %1326 = vmatprep.subr.mxu0 0.0
      %1327 = vmatpush2.msra.mxu0 0.0
      %1328 = vmatprep.subr.mxu0 0.0
      %1329 = vmatpush2.msra.mxu0 0.0
      %1330 = vmatprep.subr.mxu0 0.0
      %1331 = vmatpush2.msra.mxu0 0.0
      %1332 = vmatprep.subr.mxu0 0.0
      %1333 = vmatpush2.msra.mxu0 0.0
      %1334 = vmatprep.subr.mxu0 0.0
      %1335 = vmatpush2.msra.mxu0 0.0
      %1336 = vmatprep.subr.mxu0 0.0
      %1337 = vmatpush2.msra.mxu0 0.0
      %1338 = vmatprep.subr.mxu0 0.0
      %1339 = vmatpush2.msra.mxu0 0.0
      %1340 = vmatprep.subr.mxu0 0.0
      %1341 = vmatpush2.msra.mxu0 0.0
      %1342 = vmatprep.mubr.f32.mxu0 0.0
      %1343 = vmatmul.mubr.f32.gmra.mxu0 %v1270
      %v1344 = vpop.f32.mrf.mxu0
      %v1345 = vadd.f32 0.0, %v1344
      %v1346 = vpop.f32.mrf.mxu0
      %v1347 = vadd.f32 0.0, %v1346
      %1348 = vdwg.mxu0
      %1349 = vmatprep.subr.mxu0 %v392
      %1350 = vmatpush1.msra.mxu0 %v391
      %1351 = vmatprep.subr.mxu0 %v388
      %1352 = vmatpush1.msra.mxu0 %v387
      %1353 = vmatprep.subr.mxu0 %v384
      %1354 = vmatpush1.msra.mxu0 %v383
      %1355 = vmatprep.subr.mxu0 %v380
      %1356 = vmatpush1.msra.mxu0 %v379
      %1357 = vmatprep.subr.mxu0 %v376
      %1358 = vmatpush1.msra.mxu0 %v375
      %1359 = vmatprep.subr.mxu0 %v372
      %1360 = vmatpush1.msra.mxu0 %v371
      %1361 = vmatprep.subr.mxu0 %v368
      %1362 = vmatpush1.msra.mxu0 %v367
      %1363 = vmatprep.subr.mxu0 %v364
      %1364 = vmatpush1.msra.mxu0 %v363
      %1365 = vmatprep.subr.mxu0 %v360
      %1366 = vmatpush1.msra.mxu0 %v359
      %1367 = vmatprep.subr.mxu0 %v356
      %1368 = vmatpush1.msra.mxu0 %v355
      %1369 = vmatprep.subr.mxu0 %v352
      %1370 = vmatpush1.msra.mxu0 %v351
      %1371 = vmatprep.subr.mxu0 %v348
      %1372 = vmatpush1.msra.mxu0 %v347
      %1373 = vmatprep.subr.mxu0 %v344
      %1374 = vmatpush1.msra.mxu0 %v343
      %1375 = vmatprep.subr.mxu0 %v340
      %1376 = vmatpush1.msra.mxu0 %v339
      %1377 = vmatprep.subr.mxu0 %v336
      %1378 = vmatpush1.msra.mxu0 %v335
      %1379 = vmatprep.subr.mxu0 %v332
      %1380 = vmatpush1.msra.mxu0 %v331
      %1381 = vmatprep.subr.mxu0 0.0
      %1382 = vmatpush2.msra.mxu0 0.0
      %1383 = vmatprep.subr.mxu0 0.0
      %1384 = vmatpush2.msra.mxu0 0.0
      %1385 = vmatprep.subr.mxu0 0.0
      %1386 = vmatpush2.msra.mxu0 0.0
      %1387 = vmatprep.subr.mxu0 0.0
      %1388 = vmatpush2.msra.mxu0 0.0
      %1389 = vmatprep.subr.mxu0 0.0
      %1390 = vmatpush2.msra.mxu0 0.0
      %1391 = vmatprep.subr.mxu0 0.0
      %1392 = vmatpush2.msra.mxu0 0.0
      %1393 = vmatprep.subr.mxu0 0.0
      %1394 = vmatpush2.msra.mxu0 0.0
      %1395 = vmatprep.subr.mxu0 0.0
      %1396 = vmatpush2.msra.mxu0 0.0
      %1397 = vmatprep.subr.mxu0 0.0
      %1398 = vmatpush2.msra.mxu0 0.0
      %1399 = vmatprep.subr.mxu0 0.0
      %1400 = vmatpush2.msra.mxu0 0.0
      %1401 = vmatprep.subr.mxu0 0.0
      %1402 = vmatpush2.msra.mxu0 0.0
      %1403 = vmatprep.subr.mxu0 0.0
      %1404 = vmatpush2.msra.mxu0 0.0
      %1405 = vmatprep.subr.mxu0 0.0
      %1406 = vmatpush2.msra.mxu0 0.0
      %1407 = vmatprep.subr.mxu0 0.0
      %1408 = vmatpush2.msra.mxu0 0.0
      %1409 = vmatprep.subr.mxu0 0.0
      %1410 = vmatpush2.msra.mxu0 0.0
      %1411 = vmatprep.subr.mxu0 0.0
      %1412 = vmatpush2.msra.mxu0 0.0
      %1413 = vmatprep.mubr.f32.mxu0 0.0
      %1414 = vmatmul.mubr.f32.gmra.mxu0 %v1270
      %v1415 = vpop.f32.mrf.mxu0
      %v1416 = vadd.f32 0.0, %v1415
      %v1417 = vpop.f32.mrf.mxu0
      %v1418 = vadd.f32 0.0, %v1417
      %1419 = vdwg.mxu0
      %v1420 = vadd.f32 %v1274, %v1345
      %v1421 = vadd.f32 %v1275, %v1347
      %v1422 = vadd.f32 %v1276, %v1416
      %v1423 = vadd.f32 %v1277, %v1418
      %v1424 = vxor.u32 %v1420, 2147483648
      %v1425 = vmul.f32 %v1424, 1.442695
      %v1426 = vpow.pop %v1425
      %v1427 = vadd.f32 %v1426, 1.0
      %v1428 = vrcp.pop %v1427
      %v1429 = vmul.f32 1.0, %v1428
      %v1430 = vxor.u32 %v1421, 2147483648
      %v1431 = vmul.f32 %v1430, 1.442695
      %v1432 = vpow.pop %v1431
      %v1433 = vadd.f32 %v1432, 1.0
      %v1434 = vrcp.pop %v1433
      %v1435 = vmul.f32 1.0, %v1434
      %v1436 = vtanh.pop %v1422
      %v1437 = vxor.u32 %v1423, 2147483648
      %v1438 = vmul.f32 %v1437, 1.442695
      %v1439 = vpow.pop %v1438
      %v1440 = vadd.f32 %v1439, 1.0
      %v1441 = vrcp.pop %v1440
      %v1442 = vmul.f32 1.0, %v1441
      %v1443 = vmul.f32 %v1435, %v1268
      %v1444 = vmul.f32 %v1429, %v1436
      %v1445 = vadd.f32 %v1443, %v1444
      %v1446 = vtanh.pop %v1445
      %v1447 = vmul.f32 %v1442, %v1446
      %s1448 = smul.u32 6, 4
      %s1449 = smul.addr %s1448, 8
      %s1450 = scalar_lea.vmem [#allocation3], %s1449
      %v1451 = vld [vmem:[%s1450] sm:$0xff]
      %v1452 = vld [vmem:[%s1450 + $0x8] sm:$0xff]
      %v1453 = vld [vmem:[%s1450 + $0x10] sm:$0xff]
      %v1454 = vld [vmem:[%s1450 + $0x18] sm:$0xff]
      %1455 = vmatprep.subr.mxu0 %v390
      %1456 = vmatpush1.msra.mxu0 %v389
      %1457 = vmatprep.subr.mxu0 %v386
      %1458 = vmatpush1.msra.mxu0 %v385
      %1459 = vmatprep.subr.mxu0 %v382
      %1460 = vmatpush1.msra.mxu0 %v381
      %1461 = vmatprep.subr.mxu0 %v378
      %1462 = vmatpush1.msra.mxu0 %v377
      %1463 = vmatprep.subr.mxu0 %v374
      %1464 = vmatpush1.msra.mxu0 %v373
      %1465 = vmatprep.subr.mxu0 %v370
      %1466 = vmatpush1.msra.mxu0 %v369
      %1467 = vmatprep.subr.mxu0 %v366
      %1468 = vmatpush1.msra.mxu0 %v365
      %1469 = vmatprep.subr.mxu0 %v362
      %1470 = vmatpush1.msra.mxu0 %v361
      %1471 = vmatprep.subr.mxu0 %v358
      %1472 = vmatpush1.msra.mxu0 %v357
      %1473 = vmatprep.subr.mxu0 %v354
      %1474 = vmatpush1.msra.mxu0 %v353
      %1475 = vmatprep.subr.mxu0 %v350
      %1476 = vmatpush1.msra.mxu0 %v349
      %1477 = vmatprep.subr.mxu0 %v346
      %1478 = vmatpush1.msra.mxu0 %v345
      %1479 = vmatprep.subr.mxu0 %v342
      %1480 = vmatpush1.msra.mxu0 %v341
      %1481 = vmatprep.subr.mxu0 %v338
      %1482 = vmatpush1.msra.mxu0 %v337
      %1483 = vmatprep.subr.mxu0 %v334
      %1484 = vmatpush1.msra.mxu0 %v333
      %1485 = vmatprep.subr.mxu0 %v330
      %1486 = vmatpush1.msra.mxu0 %v329
      %1487 = vmatprep.subr.mxu0 0.0
      %1488 = vmatpush2.msra.mxu0 0.0
      %1489 = vmatprep.subr.mxu0 0.0
      %1490 = vmatpush2.msra.mxu0 0.0
      %1491 = vmatprep.subr.mxu0 0.0
      %1492 = vmatpush2.msra.mxu0 0.0
      %1493 = vmatprep.subr.mxu0 0.0
      %1494 = vmatpush2.msra.mxu0 0.0
      %1495 = vmatprep.subr.mxu0 0.0
      %1496 = vmatpush2.msra.mxu0 0.0
      %1497 = vmatprep.subr.mxu0 0.0
      %1498 = vmatpush2.msra.mxu0 0.0
      %1499 = vmatprep.subr.mxu0 0.0
      %1500 = vmatpush2.msra.mxu0 0.0
      %1501 = vmatprep.subr.mxu0 0.0
      %1502 = vmatpush2.msra.mxu0 0.0
      %1503 = vmatprep.subr.mxu0 0.0
      %1504 = vmatpush2.msra.mxu0 0.0
      %1505 = vmatprep.subr.mxu0 0.0
      %1506 = vmatpush2.msra.mxu0 0.0
      %1507 = vmatprep.subr.mxu0 0.0
      %1508 = vmatpush2.msra.mxu0 0.0
      %1509 = vmatprep.subr.mxu0 0.0
      %1510 = vmatpush2.msra.mxu0 0.0
      %1511 = vmatprep.subr.mxu0 0.0
      %1512 = vmatpush2.msra.mxu0 0.0
      %1513 = vmatprep.subr.mxu0 0.0
      %1514 = vmatpush2.msra.mxu0 0.0
      %1515 = vmatprep.subr.mxu0 0.0
      %1516 = vmatpush2.msra.mxu0 0.0
      %1517 = vmatprep.subr.mxu0 0.0
      %1518 = vmatpush2.msra.mxu0 0.0
      %1519 = vmatprep.mubr.f32.mxu0 0.0
      %1520 = vmatmul.mubr.f32.gmra.mxu0 %v1447
      %v1521 = vpop.f32.mrf.mxu0
      %v1522 = vadd.f32 0.0, %v1521
      %v1523 = vpop.f32.mrf.mxu0
      %v1524 = vadd.f32 0.0, %v1523
      %1525 = vdwg.mxu0
      %1526 = vmatprep.subr.mxu0 %v392
      %1527 = vmatpush1.msra.mxu0 %v391
      %1528 = vmatprep.subr.mxu0 %v388
      %1529 = vmatpush1.msra.mxu0 %v387
      %1530 = vmatprep.subr.mxu0 %v384
      %1531 = vmatpush1.msra.mxu0 %v383
      %1532 = vmatprep.subr.mxu0 %v380
      %1533 = vmatpush1.msra.mxu0 %v379
      %1534 = vmatprep.subr.mxu0 %v376
      %1535 = vmatpush1.msra.mxu0 %v375
      %1536 = vmatprep.subr.mxu0 %v372
      %1537 = vmatpush1.msra.mxu0 %v371
      %1538 = vmatprep.subr.mxu0 %v368
      %1539 = vmatpush1.msra.mxu0 %v367
      %1540 = vmatprep.subr.mxu0 %v364
      %1541 = vmatpush1.msra.mxu0 %v363
      %1542 = vmatprep.subr.mxu0 %v360
      %1543 = vmatpush1.msra.mxu0 %v359
      %1544 = vmatprep.subr.mxu0 %v356
      %1545 = vmatpush1.msra.mxu0 %v355
      %1546 = vmatprep.subr.mxu0 %v352
      %1547 = vmatpush1.msra.mxu0 %v351
      %1548 = vmatprep.subr.mxu0 %v348
      %1549 = vmatpush1.msra.mxu0 %v347
      %1550 = vmatprep.subr.mxu0 %v344
      %1551 = vmatpush1.msra.mxu0 %v343
      %1552 = vmatprep.subr.mxu0 %v340
      %1553 = vmatpush1.msra.mxu0 %v339
      %1554 = vmatprep.subr.mxu0 %v336
      %1555 = vmatpush1.msra.mxu0 %v335
      %1556 = vmatprep.subr.mxu0 %v332
      %1557 = vmatpush1.msra.mxu0 %v331
      %1558 = vmatprep.subr.mxu0 0.0
      %1559 = vmatpush2.msra.mxu0 0.0
      %1560 = vmatprep.subr.mxu0 0.0
      %1561 = vmatpush2.msra.mxu0 0.0
      %1562 = vmatprep.subr.mxu0 0.0
      %1563 = vmatpush2.msra.mxu0 0.0
      %1564 = vmatprep.subr.mxu0 0.0
      %1565 = vmatpush2.msra.mxu0 0.0
      %1566 = vmatprep.subr.mxu0 0.0
      %1567 = vmatpush2.msra.mxu0 0.0
      %1568 = vmatprep.subr.mxu0 0.0
      %1569 = vmatpush2.msra.mxu0 0.0
      %1570 = vmatprep.subr.mxu0 0.0
      %1571 = vmatpush2.msra.mxu0 0.0
      %1572 = vmatprep.subr.mxu0 0.0
      %1573 = vmatpush2.msra.mxu0 0.0
      %1574 = vmatprep.subr.mxu0 0.0
      %1575 = vmatpush2.msra.mxu0 0.0
      %1576 = vmatprep.subr.mxu0 0.0
      %1577 = vmatpush2.msra.mxu0 0.0
      %1578 = vmatprep.subr.mxu0 0.0
      %1579 = vmatpush2.msra.mxu0 0.0
      %1580 = vmatprep.subr.mxu0 0.0
      %1581 = vmatpush2.msra.mxu0 0.0
      %1582 = vmatprep.subr.mxu0 0.0
      %1583 = vmatpush2.msra.mxu0 0.0
      %1584 = vmatprep.subr.mxu0 0.0
      %1585 = vmatpush2.msra.mxu0 0.0
      %1586 = vmatprep.subr.mxu0 0.0
      %1587 = vmatpush2.msra.mxu0 0.0
      %1588 = vmatprep.subr.mxu0 0.0
      %1589 = vmatpush2.msra.mxu0 0.0
      %1590 = vmatprep.mubr.f32.mxu0 0.0
      %1591 = vmatmul.mubr.f32.gmra.mxu0 %v1447
      %v1592 = vpop.f32.mrf.mxu0
      %v1593 = vadd.f32 0.0, %v1592
      %v1594 = vpop.f32.mrf.mxu0
      %v1595 = vadd.f32 0.0, %v1594
      %1596 = vdwg.mxu0
      %v1597 = vadd.f32 %v1451, %v1522
      %v1598 = vadd.f32 %v1452, %v1524
      %v1599 = vadd.f32 %v1453, %v1593
      %v1600 = vadd.f32 %v1454, %v1595
      %v1601 = vxor.u32 %v1597, 2147483648
      %v1602 = vmul.f32 %v1601, 1.442695
      %v1603 = vpow.pop %v1602
      %v1604 = vadd.f32 %v1603, 1.0
      %v1605 = vrcp.pop %v1604
      %v1606 = vmul.f32 1.0, %v1605
      %v1607 = vxor.u32 %v1598, 2147483648
      %v1608 = vmul.f32 %v1607, 1.442695
      %v1609 = vpow.pop %v1608
      %v1610 = vadd.f32 %v1609, 1.0
      %v1611 = vrcp.pop %v1610
      %v1612 = vmul.f32 1.0, %v1611
      %v1613 = vtanh.pop %v1599
      %v1614 = vxor.u32 %v1600, 2147483648
      %v1615 = vmul.f32 %v1614, 1.442695
      %v1616 = vpow.pop %v1615
      %v1617 = vadd.f32 %v1616, 1.0
      %v1618 = vrcp.pop %v1617
      %v1619 = vmul.f32 1.0, %v1618
      %v1620 = vmul.f32 %v1612, %v1445
      %v1621 = vmul.f32 %v1606, %v1613
      %v1622 = vadd.f32 %v1620, %v1621
      %v1623 = vtanh.pop %v1622
      %v1624 = vmul.f32 %v1619, %v1623
      %s1625 = smul.u32 7, 4
      %s1626 = smul.addr %s1625, 8
      %s1627 = scalar_lea.vmem [#allocation3], %s1626
      %v1628 = vld [vmem:[%s1627] sm:$0xff]
      %v1629 = vld [vmem:[%s1627 + $0x8] sm:$0xff]
      %v1630 = vld [vmem:[%s1627 + $0x10] sm:$0xff]
      %v1631 = vld [vmem:[%s1627 + $0x18] sm:$0xff]
      %1632 = vmatprep.subr.mxu0 %v390
      %1633 = vmatpush1.msra.mxu0 %v389
      %1634 = vmatprep.subr.mxu0 %v386
      %1635 = vmatpush1.msra.mxu0 %v385
      %1636 = vmatprep.subr.mxu0 %v382
      %1637 = vmatpush1.msra.mxu0 %v381
      %1638 = vmatprep.subr.mxu0 %v378
      %1639 = vmatpush1.msra.mxu0 %v377
      %1640 = vmatprep.subr.mxu0 %v374
      %1641 = vmatpush1.msra.mxu0 %v373
      %1642 = vmatprep.subr.mxu0 %v370
      %1643 = vmatpush1.msra.mxu0 %v369
      %1644 = vmatprep.subr.mxu0 %v366
      %1645 = vmatpush1.msra.mxu0 %v365
      %1646 = vmatprep.subr.mxu0 %v362
      %1647 = vmatpush1.msra.mxu0 %v361
      %1648 = vmatprep.subr.mxu0 %v358
      %1649 = vmatpush1.msra.mxu0 %v357
      %1650 = vmatprep.subr.mxu0 %v354
      %1651 = vmatpush1.msra.mxu0 %v353
      %1652 = vmatprep.subr.mxu0 %v350
      %1653 = vmatpush1.msra.mxu0 %v349
      %1654 = vmatprep.subr.mxu0 %v346
      %1655 = vmatpush1.msra.mxu0 %v345
      %1656 = vmatprep.subr.mxu0 %v342
      %1657 = vmatpush1.msra.mxu0 %v341
      %1658 = vmatprep.subr.mxu0 %v338
      %1659 = vmatpush1.msra.mxu0 %v337
      %1660 = vmatprep.subr.mxu0 %v334
      %1661 = vmatpush1.msra.mxu0 %v333
      %1662 = vmatprep.subr.mxu0 %v330
      %1663 = vmatpush1.msra.mxu0 %v329
      %1664 = vmatprep.subr.mxu0 0.0
      %1665 = vmatpush2.msra.mxu0 0.0
      %1666 = vmatprep.subr.mxu0 0.0
      %1667 = vmatpush2.msra.mxu0 0.0
      %1668 = vmatprep.subr.mxu0 0.0
      %1669 = vmatpush2.msra.mxu0 0.0
      %1670 = vmatprep.subr.mxu0 0.0
      %1671 = vmatpush2.msra.mxu0 0.0
      %1672 = vmatprep.subr.mxu0 0.0
      %1673 = vmatpush2.msra.mxu0 0.0
      %1674 = vmatprep.subr.mxu0 0.0
      %1675 = vmatpush2.msra.mxu0 0.0
      %1676 = vmatprep.subr.mxu0 0.0
      %1677 = vmatpush2.msra.mxu0 0.0
      %1678 = vmatprep.subr.mxu0 0.0
      %1679 = vmatpush2.msra.mxu0 0.0
      %1680 = vmatprep.subr.mxu0 0.0
      %1681 = vmatpush2.msra.mxu0 0.0
      %1682 = vmatprep.subr.mxu0 0.0
      %1683 = vmatpush2.msra.mxu0 0.0
      %1684 = vmatprep.subr.mxu0 0.0
      %1685 = vmatpush2.msra.mxu0 0.0
      %1686 = vmatprep.subr.mxu0 0.0
      %1687 = vmatpush2.msra.mxu0 0.0
      %1688 = vmatprep.subr.mxu0 0.0
      %1689 = vmatpush2.msra.mxu0 0.0
      %1690 = vmatprep.subr.mxu0 0.0
      %1691 = vmatpush2.msra.mxu0 0.0
      %1692 = vmatprep.subr.mxu0 0.0
      %1693 = vmatpush2.msra.mxu0 0.0
      %1694 = vmatprep.subr.mxu0 0.0
      %1695 = vmatpush2.msra.mxu0 0.0
      %1696 = vmatprep.mubr.f32.mxu0 0.0
      %1697 = vmatmul.mubr.f32.gmra.mxu0 %v1624
      %v1698 = vpop.f32.mrf.mxu0
      %v1699 = vadd.f32 0.0, %v1698
      %v1700 = vpop.f32.mrf.mxu0
      %v1701 = vadd.f32 0.0, %v1700
      %1702 = vdwg.mxu0
      %1703 = vmatprep.subr.mxu0 %v392
      %1704 = vmatpush1.msra.mxu0 %v391
      %1705 = vmatprep.subr.mxu0 %v388
      %1706 = vmatpush1.msra.mxu0 %v387
      %1707 = vmatprep.subr.mxu0 %v384
      %1708 = vmatpush1.msra.mxu0 %v383
      %1709 = vmatprep.subr.mxu0 %v380
      %1710 = vmatpush1.msra.mxu0 %v379
      %1711 = vmatprep.subr.mxu0 %v376
      %1712 = vmatpush1.msra.mxu0 %v375
      %1713 = vmatprep.subr.mxu0 %v372
      %1714 = vmatpush1.msra.mxu0 %v371
      %1715 = vmatprep.subr.mxu0 %v368
      %1716 = vmatpush1.msra.mxu0 %v367
      %1717 = vmatprep.subr.mxu0 %v364
      %1718 = vmatpush1.msra.mxu0 %v363
      %1719 = vmatprep.subr.mxu0 %v360
      %1720 = vmatpush1.msra.mxu0 %v359
      %1721 = vmatprep.subr.mxu0 %v356
      %1722 = vmatpush1.msra.mxu0 %v355
      %1723 = vmatprep.subr.mxu0 %v352
      %1724 = vmatpush1.msra.mxu0 %v351
      %1725 = vmatprep.subr.mxu0 %v348
      %1726 = vmatpush1.msra.mxu0 %v347
      %1727 = vmatprep.subr.mxu0 %v344
      %1728 = vmatpush1.msra.mxu0 %v343
      %1729 = vmatprep.subr.mxu0 %v340
      %1730 = vmatpush1.msra.mxu0 %v339
      %1731 = vmatprep.subr.mxu0 %v336
      %1732 = vmatpush1.msra.mxu0 %v335
      %1733 = vmatprep.subr.mxu0 %v332
      %1734 = vmatpush1.msra.mxu0 %v331
      %1735 = vmatprep.subr.mxu0 0.0
      %1736 = vmatpush2.msra.mxu0 0.0
      %1737 = vmatprep.subr.mxu0 0.0
      %1738 = vmatpush2.msra.mxu0 0.0
      %1739 = vmatprep.subr.mxu0 0.0
      %1740 = vmatpush2.msra.mxu0 0.0
      %1741 = vmatprep.subr.mxu0 0.0
      %1742 = vmatpush2.msra.mxu0 0.0
      %1743 = vmatprep.subr.mxu0 0.0
      %1744 = vmatpush2.msra.mxu0 0.0
      %1745 = vmatprep.subr.mxu0 0.0
      %1746 = vmatpush2.msra.mxu0 0.0
      %1747 = vmatprep.subr.mxu0 0.0
      %1748 = vmatpush2.msra.mxu0 0.0
      %1749 = vmatprep.subr.mxu0 0.0
      %1750 = vmatpush2.msra.mxu0 0.0
      %1751 = vmatprep.subr.mxu0 0.0
      %1752 = vmatpush2.msra.mxu0 0.0
      %1753 = vmatprep.subr.mxu0 0.0
      %1754 = vmatpush2.msra.mxu0 0.0
      %1755 = vmatprep.subr.mxu0 0.0
      %1756 = vmatpush2.msra.mxu0 0.0
      %1757 = vmatprep.subr.mxu0 0.0
      %1758 = vmatpush2.msra.mxu0 0.0
      %1759 = vmatprep.subr.mxu0 0.0
      %1760 = vmatpush2.msra.mxu0 0.0
      %1761 = vmatprep.subr.mxu0 0.0
      %1762 = vmatpush2.msra.mxu0 0.0
      %1763 = vmatprep.subr.mxu0 0.0
      %1764 = vmatpush2.msra.mxu0 0.0
      %1765 = vmatprep.subr.mxu0 0.0
      %1766 = vmatpush2.msra.mxu0 0.0
      %1767 = vmatprep.mubr.f32.mxu0 0.0
      %1768 = vmatmul.mubr.f32.gmra.mxu0 %v1624
      %v1769 = vpop.f32.mrf.mxu0
      %v1770 = vadd.f32 0.0, %v1769
      %v1771 = vpop.f32.mrf.mxu0
      %v1772 = vadd.f32 0.0, %v1771
      %1773 = vdwg.mxu0
      %v1774 = vadd.f32 %v1628, %v1699
      %v1775 = vadd.f32 %v1629, %v1701
      %v1776 = vadd.f32 %v1630, %v1770
      %v1777 = vadd.f32 %v1631, %v1772
      %v1778 = vxor.u32 %v1774, 2147483648
      %v1779 = vmul.f32 %v1778, 1.442695
      %v1780 = vpow.pop %v1779
      %v1781 = vadd.f32 %v1780, 1.0
      %v1782 = vrcp.pop %v1781
      %v1783 = vmul.f32 1.0, %v1782
      %v1784 = vxor.u32 %v1775, 2147483648
      %v1785 = vmul.f32 %v1784, 1.442695
      %v1786 = vpow.pop %v1785
      %v1787 = vadd.f32 %v1786, 1.0
      %v1788 = vrcp.pop %v1787
      %v1789 = vmul.f32 1.0, %v1788
      %v1790 = vtanh.pop %v1776
      %v1791 = vxor.u32 %v1777, 2147483648
      %v1792 = vmul.f32 %v1791, 1.442695
      %v1793 = vpow.pop %v1792
      %v1794 = vadd.f32 %v1793, 1.0
      %v1795 = vrcp.pop %v1794
      %v1796 = vmul.f32 1.0, %v1795
      %v1797 = vmul.f32 %v1789, %v1622
      %v1798 = vmul.f32 %v1783, %v1790
      %v1799 = vadd.f32 %v1797, %v1798
      %v1800 = vtanh.pop %v1799
      %v1801 = vmul.f32 %v1796, %v1800
      %v1802 = vpack.c.bf16 %v1801, %v1801
      %1803 = vst [vmem:[#allocation2] sm:$0xf] %v1802
    $region37: #{tpu_custom_call.1} parent=1 // pred_fallthru
      _
    %v1804 = vld [vmem:[#allocation2] sm:$0xf]
    %v1805 = vld [vmem:[#allocation7] sm:$0xf]
    %v1806 = vld [vmem:[#allocation7 + $0x4] sm:$0xf]
    %v1807 = vld [vmem:[#allocation7 + $0x8] sm:$0xf]
    %v1808 = vld [vmem:[#allocation7 + $0xc] sm:$0xf]
    %v1809 = vld [vmem:[#allocation7 + $0x10] sm:$0xf]
    %v1810 = vld [vmem:[#allocation7 + $0x14] sm:$0xf]
    %v1811 = vld [vmem:[#allocation7 + $0x18] sm:$0xf]
    %v1812 = vld [vmem:[#allocation7 + $0x1c] sm:$0xf]
    %v1813 = vld [vmem:[#allocation7 + $0x20] sm:$0xf]
    %v1814 = vld [vmem:[#allocation7 + $0x24] sm:$0xf]
    %v1815 = vld [vmem:[#allocation7 + $0x28] sm:$0xf]
    %v1816 = vld [vmem:[#allocation7 + $0x2c] sm:$0xf]
    %v1817 = vld [vmem:[#allocation7 + $0x30] sm:$0xf]
    %v1818 = vld [vmem:[#allocation7 + $0x34] sm:$0xf]
    %v1819 = vld [vmem:[#allocation7 + $0x38] sm:$0xf]
    %v1820 = vld [vmem:[#allocation7 + $0x3c] sm:$0xf]
    %v1821 = vld [vmem:[%s5] sm:$0x1]
    %v1823 = vlaneseq
    %v1824 = vshrl.u32 %v1823, 7
    %v1825 = vsub.s32 0, %v1824
    %v1826 = vrot.slane %v1821, %v1825
    %v1844 = vunpack.c.l.b16 %v1805
    %v1845 = vunpack.c.l.b16 %v1806
    %v1846 = vunpack.c.l.b16 %v1807
    %v1847 = vunpack.c.l.b16 %v1808
    %v1848 = vunpack.c.l.b16 %v1809
    %v1849 = vunpack.c.l.b16 %v1810
    %v1850 = vunpack.c.l.b16 %v1811
    %v1851 = vunpack.c.l.b16 %v1812
    %v1852 = vunpack.c.l.b16 %v1813
    %v1853 = vunpack.c.l.b16 %v1814
    %v1854 = vunpack.c.l.b16 %v1815
    %v1855 = vunpack.c.l.b16 %v1816
    %v1856 = vunpack.c.l.b16 %v1817
    %v1857 = vunpack.c.l.b16 %v1818
    %v1858 = vunpack.c.l.b16 %v1819
    %v1859 = vunpack.c.l.b16 %v1820
    %v1860 = vpack.c.b16 %v1845, %v1844
    %v1861 = vpack.c.b16 %v1847, %v1846
    %v1862 = vpack.c.b16 %v1849, %v1848
    %v1863 = vpack.c.b16 %v1851, %v1850
    %v1864 = vpack.c.b16 %v1853, %v1852
    %v1865 = vpack.c.b16 %v1855, %v1854
    %v1866 = vpack.c.b16 %v1857, %v1856
    %v1867 = vpack.c.b16 %v1859, %v1858
    %1876 = vmatprep.subr.bf16.mxu0 0
    %1877 = vmatpush1.bf16.msra.mxu0 %v1867
    %1878 = vmatprep.subr.bf16.mxu0 0
    %1879 = vmatpush1.bf16.msra.mxu0 %v1866
    %1880 = vmatprep.subr.bf16.mxu0 0
    %1881 = vmatpush1.bf16.msra.mxu0 %v1865
    %1882 = vmatprep.subr.bf16.mxu0 0
    %1883 = vmatpush1.bf16.msra.mxu0 %v1864
    %1884 = vmatprep.subr.bf16.mxu0 0
    %1885 = vmatpush1.bf16.msra.mxu0 %v1863
    %1886 = vmatprep.subr.bf16.mxu0 0
    %1887 = vmatpush1.bf16.msra.mxu0 %v1862
    %1888 = vmatprep.subr.bf16.mxu0 0
    %1889 = vmatpush1.bf16.msra.mxu0 %v1861
    %1890 = vmatprep.subr.bf16.mxu0 0
    %1891 = vmatpush1.bf16.msra.mxu0 %v1860
    %1892 = vmatprep.subr.bf16.mxu0 0
    %1893 = vmatpush2.bf16.msra.mxu0 0
    %1894 = vmatprep.subr.bf16.mxu0 0
    %1895 = vmatpush2.bf16.msra.mxu0 0
    %1896 = vmatprep.subr.bf16.mxu0 0
    %1897 = vmatpush2.bf16.msra.mxu0 0
    %1898 = vmatprep.subr.bf16.mxu0 0
    %1899 = vmatpush2.bf16.msra.mxu0 0
    %1900 = vmatprep.subr.bf16.mxu0 0
    %1901 = vmatpush2.bf16.msra.mxu0 0
    %1902 = vmatprep.subr.bf16.mxu0 0
    %1903 = vmatpush2.bf16.msra.mxu0 0
    %1904 = vmatprep.subr.bf16.mxu0 0
    %1905 = vmatpush2.bf16.msra.mxu0 0
    %1906 = vmatprep.subr.bf16.mxu0 0
    %1907 = vmatpush2.bf16.msra.mxu0 0
    %1908 = vmatprep.mubr.bf16.mxu0 0
    %1909 = vmatmul.mubr.bf16.gmra.mxu0 %v1804
    %v1910 = vpop.f32.mrf.mxu0
    %v1911 = vadd.f32 %v1826, %v1910
    %v1912 = vpop.f32.mrf.mxu0
    %v1913 = vpop.f32.mrf.mxu0
    %v1914 = vpop.f32.mrf.mxu0
    %1915 = vdwg.mxu0
    %1916 = vst [vmem:[#allocation9] sm:$0xff] %v1911
    // Predicated region
    $region38: #{tpu_custom_call.1} parent=1 // pred_check
      _
    $region39: #{tpu_custom_call.1} parent=1 // pred_check_branch
      %1918 = sbr.rel (0) target = $region41
    $region40: #{tpu_custom_call.1} parent=1 // pred_region
      %s1920 = ssub.s32 128, 128
      %1921 = vsyncadd [#allocation6], %s1920
      %s1923 = sshll.u32 [#allocation9], 4
      %s1924 = int_to_ptr.vmem [resolvable:$true] %s1923
      %1926 = dma.vmem_to_hbm [thread:$0]  %s1924, 128, %s6, [#allocation6]
    $region41: #{tpu_custom_call.1} parent=1 // pred_fallthru
      _
    // Predicated region
    $region42: #{tpu_custom_call.1} parent=1 // pred_check
      _
    $region43: #{tpu_custom_call.1} parent=1 // pred_check_branch
      %1928 = sbr.rel (0) target = $region45
    $region44: #{tpu_custom_call.1} parent=1 // pred_region
      %1929 = dma.done [#allocation6], 128
    $region45: #{tpu_custom_call.1} parent=1 // pred_fallthru
      _
    %1930 = vsyncpa [#allocation5], 1
    %1931 = vsyncpa [#allocation8], 1
    %1932 = vsyncpa [#allocation6], 1

</llo_original>
